<compile_context>
chip_gen: v7x
topology: tpu7x:2x2x1
jax: 0.10.0
libtpu: 0.0.40
codegen_flags: <defaults>
</compile_context>

<pallas_src>
import math

import jax
import jax.numpy as jnp
from jax.experimental import pallas as pl
from jax.experimental.pallas import tpu as pltpu

_EPS = 1e-5


# ----------------------------------------------------------------------------
# Fused Pallas kernel: whole bottleneck block for one image per grid step
# ----------------------------------------------------------------------------

def _fused_bottleneck_kernel(x_ref, w1_ref, b1_ref, w2_ref, b2_ref,
                             w3_ref, b3_ref, o_ref, h1p_ref):
    H, W, Cin = x_ref.shape
    D = w1_ref.shape[1]
    Cout = o_ref.shape[2]
    M = H * W

    # TODO(synk): residual uses the bf16-rounded input (x arrives as bf16);
    # pass an f32 copy of x if bit-accuracy of the skip path is required.
    x2d = x_ref[...].reshape(M, Cin)                       # bf16, (M, Cin)

    # --- stage 1: conv_reduce (1x1) [BN scale folded into w1] + bias + relu ---
    y1 = jnp.dot(x2d, w1_ref[...], preferred_element_type=jnp.float32)
    h1 = jnp.maximum(y1 + b1_ref[...], 0.0)                # (M, D) f32
    h1_bf = h1.astype(jnp.bfloat16).reshape(H, W, D)       # bf16 once, reused 3x

    # --- build row-im2col in bf16 scratch: (H+2, W, 3*D), halo only along H.
    # Lane blocks: [0:D]=left neighbor (kx=0), [D:2D]=center, [2D:3D]=right.
    zrow = jnp.zeros((1, W, 3 * D), jnp.bfloat16)
    h1p_ref[0:1, :, :] = zrow                              # top halo row
    h1p_ref[H + 1:H + 2, :, :] = zrow                      # bottom halo row
    zcol = jnp.zeros((H, 1, D), jnp.bfloat16)
    h1p_ref[1:H + 1, 0:1, 0:D] = zcol                      # w=0 of left block
    h1p_ref[1:H + 1, W - 1:W, 2 * D:3 * D] = zcol          # w=W-1 of right block
    h1p_ref[1:H + 1, :, D:2 * D] = h1_bf                   # center (full width)
    h1p_ref[1:H + 1, 1:W, 0:D] = h1_bf[:, 0:W - 1, :]      # shifted right: h1[w-1]
    h1p_ref[1:H + 1, 0:W - 1, 2 * D:3 * D] = h1_bf[:, 1:W, :]  # shifted left: h1[w+1]

    # --- stage 2: grouped 3x3 conv as 3 matmuls (K = 3*D), f32 accumulation ---
    acc = jnp.zeros((M, D), jnp.float32)
    for ky in range(3):                                    # static unroll
        tap = h1p_ref[ky:ky + H, :, :].reshape(M, 3 * D)   # whole-tile outer slice
        acc = acc + jnp.dot(tap, w2_ref[ky],
                            preferred_element_type=jnp.float32)
    h2 = jnp.maximum(acc + b2_ref[...], 0.0)               # (M, D) f32

    # --- stage 3: conv_expand (1x1) + bias + residual add + relu ---
    y3 = jnp.dot(h2.astype(jnp.bfloat16), w3_ref[...],
                 preferred_element_type=jnp.float32)
    out = jnp.maximum(y3 + b3_ref[...] + x2d.astype(jnp.float32), 0.0)
    o_ref[...] = out.astype(o_ref.dtype).reshape(H, W, Cout)


# ----------------------------------------------------------------------------
# Glue: BN folding, block-diagonal stacked-tap weights, wrapper
# ----------------------------------------------------------------------------

def _bn_fold(gamma, beta, mean, var):
    scale = gamma / jnp.sqrt(var + _EPS)
    bias = beta - mean * scale
    return scale, bias


def _build_im2col_tap_weights(w_conv, cardinality):
    """torch grouped weight (D, dim, 3, 3) -> (3, 3*D, D): per-ky, block-diag,
    K axis ordered [kx=0 | kx=1 | kx=2] (each D wide) to match the im2col scratch."""
    D, dim = w_conv.shape[0], w_conv.shape[1]
    G = cardinality
    # (g, co, ci, ky, kx) -> (ky, kx, g, ci, co)
    w = w_conv.reshape(G, dim, dim, 3, 3).transpose(3, 4, 0, 2, 1)  # (3,3,G,dim,dim)
    w2 = jnp.zeros((3, 3, D, D), w_conv.dtype)
    for g in range(G):                                     # trace-time loop (G small)
        w2 = w2.at[:, :, g * dim:(g + 1) * dim, g * dim:(g + 1) * dim].set(w[:, :, g])
    return w2.reshape(3, 3 * D, D)


def resnext_bottleneck_forward(x_nchw, params, cardinality, stride=1):
    """Pallas implementation of ResNeXtBottleneck.forward (downsample=None)."""
    N, Cin, H, W = x_nchw.shape
    D = params["w_conv"].shape[0]           # dim * cardinality
    Cout = params["w_expand"].shape[0]      # planes * 4
    assert stride == 1 and Cin == Cout, "downsample=None requires matching residual shape"

    # NCHW -> NHWC (channels on the lane axis); bf16 operands for the MXU.
    x_nhwc = jnp.transpose(x_nchw, (0, 2, 3, 1)).astype(jnp.bfloat16)

    # Fold eval-mode BN into per-output-channel scale/bias; fold the scales
    # into the conv weights (exact) BEFORE the bf16 cast, keep only biases.
    s1, b1 = _bn_fold(*params["bn_reduce"])
    s2, b2 = _bn_fold(*params["bn"])
    s3, b3 = _bn_fold(*params["bn_expand"])

    w1 = (params["w_reduce"].reshape(D, Cin).T * s1[None, :]).astype(jnp.bfloat16)
    w2 = (_build_im2col_tap_weights(params["w_conv"], cardinality)
          * s2[None, None, :]).astype(jnp.bfloat16)                     # (3, 3D, D)
    w3 = (params["w_expand"].reshape(Cout, D).T * s3[None, :]).astype(jnp.bfloat16)

    M = H * W
    flops = 2 * N * M * (Cin * D + 9 * D * D + D * Cout)
    bytes_accessed = (N * M * Cin * 2 + N * M * Cout * 2
                      + (w1.size + w2.size + w3.size) * 2
                      + (D + D + Cout) * 4)

    out_nhwc = pl.pallas_call(
        _fused_bottleneck_kernel,
        out_shape=jax.ShapeDtypeStruct((N, H, W, Cout), jnp.bfloat16),
        grid=(N,),
        in_specs=[
            pl.BlockSpec((None, H, W, Cin), lambda n: (n, 0, 0, 0)),   # x (per image)
            pl.BlockSpec((Cin, D), lambda n: (0, 0)),                  # w1 (resident)
            pl.BlockSpec((1, D), lambda n: (0, 0)),                    # bn1 bias
            pl.BlockSpec((3, 3 * D, D), lambda n: (0, 0, 0)),          # w2 per-ky taps
            pl.BlockSpec((1, D), lambda n: (0, 0)),                    # bn2 bias
            pl.BlockSpec((D, Cout), lambda n: (0, 0)),                 # w3
            pl.BlockSpec((1, Cout), lambda n: (0, 0)),                 # bn3 bias
        ],
        out_specs=pl.BlockSpec((None, H, W, Cout), lambda n: (n, 0, 0, 0)),
        scratch_shapes=[pltpu.VMEM((H + 2, W, 3 * D), jnp.bfloat16)],  # row-im2col
        compiler_params=pltpu.CompilerParams(
            dimension_semantics=("parallel",),
            vmem_limit_bytes=32 * 1024 * 1024),
        cost_estimate=pl.CostEstimate(flops=flops, transcendentals=0,
                                      bytes_accessed=bytes_accessed),
    )(x_nhwc, w1, b1.reshape(1, D), w2, b2.reshape(1, D), w3, b3.reshape(1, Cout))

    # Back to NCHW; keep the module's dtype semantics (input dtype out).
    return jnp.transpose(out_nhwc, (0, 3, 1, 2)).astype(x_nchw.dtype)


# ----------------------------------------------------------------------------
# Pure-JAX reference (lax.conv, f32) for correctness check
# ----------------------------------------------------------------------------

def _reference_forward(x, p, cardinality, stride=1):
    def bn(y, gamma, beta, mean, var):
        sh = (1, -1, 1, 1)
        return ((y - mean.reshape(sh)) / jnp.sqrt(var.reshape(sh) + _EPS)
                * gamma.reshape(sh) + beta.reshape(sh))

    dn = ("NCHW", "OIHW", "NCHW")
    y = jax.lax.conv_general_dilated(x, p["w_reduce"], (1, 1), "VALID", dimension_numbers=dn)
    y = jax.nn.relu(bn(y, *p["bn_reduce"]))
    y = jax.lax.conv_general_dilated(y, p["w_conv"], (stride, stride), ((1, 1), (1, 1)),
                                     dimension_numbers=dn, feature_group_count=cardinality)
    y = jax.nn.relu(bn(y, *p["bn"]))
    y = jax.lax.conv_general_dilated(y, p["w_expand"], (1, 1), "VALID", dimension_numbers=dn)
    y = bn(y, *p["bn_expand"])
    return jax.nn.relu(x + y)


# ----------------------------------------------------------------------------
# Deterministic parameter construction
# ----------------------------------------------------------------------------

def make_params(key, inplanes, planes, cardinality, base_width):
    dim = int(math.floor(planes * (base_width / 64.0)))
    D = dim * cardinality
    Cout = planes * 4
    ks = jax.random.split(key, 15)

    def bn_params(k0, k1, k2, k3, c):
        gamma = jax.random.uniform(k0, (c,), jnp.float32, 0.5, 1.5)
        beta = 0.1 * jax.random.normal(k1, (c,), jnp.float32)
        mean = 0.1 * jax.random.normal(k2, (c,), jnp.float32)
        var = jax.random.uniform(k3, (c,), jnp.float32, 0.5, 1.5)
        return (gamma, beta, mean, var)

    return {
        "w_reduce": 0.1 * jax.random.normal(ks[0], (D, inplanes, 1, 1), jnp.float32),
        "bn_reduce": bn_params(ks[1], ks[2], ks[3], ks[4], D),
        "w_conv": 0.1 * jax.random.normal(ks[5], (D, dim, 3, 3), jnp.float32),
        "bn": bn_params(ks[6], ks[7], ks[8], ks[9], D),
        "w_expand": 0.1 * jax.random.normal(ks[10], (Cout, D, 1, 1), jnp.float32),
        "bn_expand": bn_params(ks[11], ks[12], ks[13], ks[14], Cout),
    }


if __name__ == "__main__":
    # Small config: inplanes = planes*4 so downsample=None is valid.
    planes = 8
    cardinality = 4
    base_width = 64          # dim = 8, D = dim*cardinality = 32
    inplanes = planes * 4    # 32
    stride = 1

    key = jax.random.PRNGKey(0)
    kx, kp = jax.random.split(key)
    x = jax.random.normal(kx, (2, inplanes, 16, 16), jnp.float32)   # NCHW input

    params = make_params(kp, inplanes, planes, cardinality, base_width)

    fwd = jax.jit(resnext_bottleneck_forward, static_argnames=("cardinality", "stride"))
    out = jax.block_until_ready(fwd(x, params, cardinality=cardinality, stride=stride))

    ref = jax.block_until_ready(_reference_forward(x, params, cardinality, stride=stride))
    assert out.shape == ref.shape == (2, inplanes, 16, 16)
    # bf16 MXU operands / bf16 writeback vs f32 lax.conv reference -> widened tolerance.
    if not jnp.allclose(out, ref, rtol=5e-2, atol=5e-2):
        err = float(jnp.max(jnp.abs(out - ref)))
        raise AssertionError(f"Pallas output mismatch vs reference (max abs err {err})")

    print("KERNEL_OK")
</pallas_src>

<mosaic_0001>
module attributes {stable_mosaic.version = 11 : i64} {
  func.func @_fused_bottleneck_kernel(%arg0: i32, %arg1: memref<1x16x16x32xbf16, #tpu.memory_space<vmem>>, %arg2: memref<32x32xbf16, #tpu.memory_space<vmem>>, %arg3: memref<1x32xf32, #tpu.memory_space<vmem>>, %arg4: memref<3x96x32xbf16, #tpu.memory_space<vmem>>, %arg5: memref<1x32xf32, #tpu.memory_space<vmem>>, %arg6: memref<32x32xbf16, #tpu.memory_space<vmem>>, %arg7: memref<1x32xf32, #tpu.memory_space<vmem>>, %arg8: memref<1x16x16x32xbf16, #tpu.memory_space<vmem>>, %arg9: memref<18x16x96xbf16, #tpu.memory_space<vmem>>) attributes {dimension_semantics = [#tpu.dimension_semantics<parallel>], iteration_bounds = array<i64: 2>, scalar_prefetch = 0 : i64, scratch_operands = 1 : i64, tpu.core_type = #tpu.core_type<tc>, window_params = [{transform_indices = @transform_0, window_bounds = array<i64: 1, 16, 16, 32>}, {pipeline_mode = #tpu.pipeline_mode<synchronous>, transform_indices = @transform_1, window_bounds = array<i64: 32, 32>}, {pipeline_mode = #tpu.pipeline_mode<synchronous>, transform_indices = @transform_2, window_bounds = array<i64: 1, 32>}, {pipeline_mode = #tpu.pipeline_mode<synchronous>, transform_indices = @transform_3, window_bounds = array<i64: 3, 96, 32>}, {pipeline_mode = #tpu.pipeline_mode<synchronous>, transform_indices = @transform_4, window_bounds = array<i64: 1, 32>}, {pipeline_mode = #tpu.pipeline_mode<synchronous>, transform_indices = @transform_5, window_bounds = array<i64: 32, 32>}, {pipeline_mode = #tpu.pipeline_mode<synchronous>, transform_indices = @transform_6, window_bounds = array<i64: 1, 32>}, {transform_indices = @transform_7, window_bounds = array<i64: 1, 16, 16, 32>}]} {
    %c0 = arith.constant 0 : index
    %c0_0 = arith.constant 0 : index
    %c0_1 = arith.constant 0 : index
    %c0_2 = arith.constant 0 : index
    %0 = vector.load %arg1[%c0, %c0_0, %c0_1, %c0_2] : memref<1x16x16x32xbf16, #tpu.memory_space<vmem>>, vector<1x16x16x32xbf16>
    %1 = vector.shape_cast %0 : vector<1x16x16x32xbf16> to vector<16x16x32xbf16>
    %2 = vector.shape_cast %1 : vector<16x16x32xbf16> to vector<256x32xbf16>
    %c0_3 = arith.constant 0 : index
    %c0_4 = arith.constant 0 : index
    %3 = vector.load %arg2[%c0_3, %c0_4] : memref<32x32xbf16, #tpu.memory_space<vmem>>, vector<32x32xbf16>
    %cst = arith.constant dense<0.000000e+00> : vector<256x32xf32>
    %4 = tpu.matmul %2, %3, %cst {dimension_numbers = #tpu.dot_dimension_numbers<[1], [0], [0], [1], [0, 0, 1, 1], [], []>} : vector<256x32xbf16>, vector<32x32xbf16>, vector<256x32xf32> -> vector<256x32xf32>
    %c0_5 = arith.constant 0 : index
    %c0_6 = arith.constant 0 : index
    %5 = vector.load %arg3[%c0_5, %c0_6] : memref<1x32xf32, #tpu.memory_space<vmem>>, vector<1x32xf32>
    %6 = vector.broadcast %5 : vector<1x32xf32> to vector<256x32xf32>
    %7 = arith.addf %4, %6 : vector<256x32xf32>
    %cst_7 = arith.constant 0.000000e+00 : f32
    %8 = vector.broadcast %cst_7 : f32 to vector<256x32xf32>
    %9 = arith.maximumf %7, %8 : vector<256x32xf32>
    %10 = arith.truncf %9 : vector<256x32xf32> to vector<256x32xbf16>
    %11 = vector.shape_cast %10 : vector<256x32xbf16> to vector<16x16x32xbf16>
    %cst_8 = arith.constant 0.000000e+00 : bf16
    %12 = vector.broadcast %cst_8 : bf16 to vector<1x16x96xbf16>
    %c0_9 = arith.constant 0 : index
    %c0_10 = arith.constant 0 : index
    %c0_11 = arith.constant 0 : index
    %13 = vector.load %arg9[%c0_9, %c0_10, %c0_11] : memref<18x16x96xbf16, #tpu.memory_space<vmem>>, vector<1x16x96xbf16>
    tpu.vector_store %arg9[%c0_9, %c0_10, %c0_11], %12 {strides = array<i32>} : memref<18x16x96xbf16, #tpu.memory_space<vmem>>, vector<1x16x96xbf16>,
    %c17 = arith.constant 17 : index
    %c0_12 = arith.constant 0 : index
    %c0_13 = arith.constant 0 : index
    %14 = vector.load %arg9[%c17, %c0_12, %c0_13] : memref<18x16x96xbf16, #tpu.memory_space<vmem>>, vector<1x16x96xbf16>
    tpu.vector_store %arg9[%c17, %c0_12, %c0_13], %12 {strides = array<i32>} : memref<18x16x96xbf16, #tpu.memory_space<vmem>>, vector<1x16x96xbf16>,
    %cst_14 = arith.constant 0.000000e+00 : bf16
    %15 = vector.broadcast %cst_14 : bf16 to vector<16x1x32xbf16>
    %c1 = arith.constant 1 : index
    %c0_15 = arith.constant 0 : index
    %c0_16 = arith.constant 0 : index
    %16 = vector.load %arg9[%c1, %c0_15, %c0_16] : memref<18x16x96xbf16, #tpu.memory_space<vmem>>, vector<16x1x32xbf16>
    tpu.vector_store %arg9[%c1, %c0_15, %c0_16], %15 {strides = array<i32>} : memref<18x16x96xbf16, #tpu.memory_space<vmem>>, vector<16x1x32xbf16>,
    %c1_17 = arith.constant 1 : index
    %c15 = arith.constant 15 : index
    %c64 = arith.constant 64 : index
    %17 = vector.load %arg9[%c1_17, %c15, %c64] : memref<18x16x96xbf16, #tpu.memory_space<vmem>>, vector<16x1x32xbf16>
    tpu.vector_store %arg9[%c1_17, %c15, %c64], %15 {strides = array<i32>} : memref<18x16x96xbf16, #tpu.memory_space<vmem>>, vector<16x1x32xbf16>,
    %c1_18 = arith.constant 1 : index
    %c0_19 = arith.constant 0 : index
    %c32 = arith.constant 32 : index
    %18 = vector.load %arg9[%c1_18, %c0_19, %c32] : memref<18x16x96xbf16, #tpu.memory_space<vmem>>, vector<16x16x32xbf16>
    tpu.vector_store %arg9[%c1_18, %c0_19, %c32], %11 {strides = array<i32>} : memref<18x16x96xbf16, #tpu.memory_space<vmem>>, vector<16x16x32xbf16>,
    %19 = vector.extract_strided_slice %11 {offsets = [0, 0, 0], sizes = [16, 15, 32], strides = [1, 1, 1]} : vector<16x16x32xbf16> to vector<16x15x32xbf16>
    %c1_20 = arith.constant 1 : index
    %c1_21 = arith.constant 1 : index
    %c0_22 = arith.constant 0 : index
    %20 = vector.load %arg9[%c1_20, %c1_21, %c0_22] : memref<18x16x96xbf16, #tpu.memory_space<vmem>>, vector<16x15x32xbf16>
    tpu.vector_store %arg9[%c1_20, %c1_21, %c0_22], %19 {strides = array<i32>} : memref<18x16x96xbf16, #tpu.memory_space<vmem>>, vector<16x15x32xbf16>,
    %21 = vector.extract_strided_slice %11 {offsets = [0, 1, 0], sizes = [16, 15, 32], strides = [1, 1, 1]} : vector<16x16x32xbf16> to vector<16x15x32xbf16>
    %c1_23 = arith.constant 1 : index
    %c0_24 = arith.constant 0 : index
    %c64_25 = arith.constant 64 : index
    %22 = vector.load %arg9[%c1_23, %c0_24, %c64_25] : memref<18x16x96xbf16, #tpu.memory_space<vmem>>, vector<16x15x32xbf16>
    tpu.vector_store %arg9[%c1_23, %c0_24, %c64_25], %21 {strides = array<i32>} : memref<18x16x96xbf16, #tpu.memory_space<vmem>>, vector<16x15x32xbf16>,
    %cst_26 = arith.constant 0.000000e+00 : f32
    %23 = vector.broadcast %cst_26 : f32 to vector<256x32xf32>
    %c0_27 = arith.constant 0 : index
    %c0_28 = arith.constant 0 : index
    %c0_29 = arith.constant 0 : index
    %24 = vector.load %arg9[%c0_27, %c0_28, %c0_29] : memref<18x16x96xbf16, #tpu.memory_space<vmem>>, vector<16x16x96xbf16>
    %25 = vector.shape_cast %24 : vector<16x16x96xbf16> to vector<256x96xbf16>
    %c0_30 = arith.constant 0 : index
    %c0_31 = arith.constant 0 : index
    %c0_32 = arith.constant 0 : index
    %26 = vector.load %arg4[%c0_30, %c0_31, %c0_32] : memref<3x96x32xbf16, #tpu.memory_space<vmem>>, vector<1x96x32xbf16>
    %27 = vector.shape_cast %26 : vector<1x96x32xbf16> to vector<96x32xbf16>
    %cst_33 = arith.constant dense<0.000000e+00> : vector<256x32xf32>
    %28 = tpu.matmul %25, %27, %cst_33 {dimension_numbers = #tpu.dot_dimension_numbers<[1], [0], [0], [1], [0, 0, 1, 1], [], []>} : vector<256x96xbf16>, vector<96x32xbf16>, vector<256x32xf32> -> vector<256x32xf32>
    %29 = arith.addf %23, %28 : vector<256x32xf32>
    %c1_34 = arith.constant 1 : index
    %c0_35 = arith.constant 0 : index
    %c0_36 = arith.constant 0 : index
    %30 = vector.load %arg9[%c1_34, %c0_35, %c0_36] : memref<18x16x96xbf16, #tpu.memory_space<vmem>>, vector<16x16x96xbf16>
    %31 = vector.shape_cast %30 : vector<16x16x96xbf16> to vector<256x96xbf16>
    %c1_37 = arith.constant 1 : index
    %c0_38 = arith.constant 0 : index
    %c0_39 = arith.constant 0 : index
    %32 = vector.load %arg4[%c1_37, %c0_38, %c0_39] : memref<3x96x32xbf16, #tpu.memory_space<vmem>>, vector<1x96x32xbf16>
    %33 = vector.shape_cast %32 : vector<1x96x32xbf16> to vector<96x32xbf16>
    %cst_40 = arith.constant dense<0.000000e+00> : vector<256x32xf32>
    %34 = tpu.matmul %31, %33, %cst_40 {dimension_numbers = #tpu.dot_dimension_numbers<[1], [0], [0], [1], [0, 0, 1, 1], [], []>} : vector<256x96xbf16>, vector<96x32xbf16>, vector<256x32xf32> -> vector<256x32xf32>
    %35 = arith.addf %29, %34 : vector<256x32xf32>
    %c2 = arith.constant 2 : index
    %c0_41 = arith.constant 0 : index
    %c0_42 = arith.constant 0 : index
    %36 = vector.load %arg9[%c2, %c0_41, %c0_42] : memref<18x16x96xbf16, #tpu.memory_space<vmem>>, vector<16x16x96xbf16>
    %37 = vector.shape_cast %36 : vector<16x16x96xbf16> to vector<256x96xbf16>
    %c2_43 = arith.constant 2 : index
    %c0_44 = arith.constant 0 : index
    %c0_45 = arith.constant 0 : index
    %38 = vector.load %arg4[%c2_43, %c0_44, %c0_45] : memref<3x96x32xbf16, #tpu.memory_space<vmem>>, vector<1x96x32xbf16>
    %39 = vector.shape_cast %38 : vector<1x96x32xbf16> to vector<96x32xbf16>
    %cst_46 = arith.constant dense<0.000000e+00> : vector<256x32xf32>
    %40 = tpu.matmul %37, %39, %cst_46 {dimension_numbers = #tpu.dot_dimension_numbers<[1], [0], [0], [1], [0, 0, 1, 1], [], []>} : vector<256x96xbf16>, vector<96x32xbf16>, vector<256x32xf32> -> vector<256x32xf32>
    %41 = arith.addf %35, %40 : vector<256x32xf32>
    %c0_47 = arith.constant 0 : index
    %c0_48 = arith.constant 0 : index
    %42 = vector.load %arg5[%c0_47, %c0_48] : memref<1x32xf32, #tpu.memory_space<vmem>>, vector<1x32xf32>
    %43 = vector.broadcast %42 : vector<1x32xf32> to vector<256x32xf32>
    %44 = arith.addf %41, %43 : vector<256x32xf32>
    %cst_49 = arith.constant 0.000000e+00 : f32
    %45 = vector.broadcast %cst_49 : f32 to vector<256x32xf32>
    %46 = arith.maximumf %44, %45 : vector<256x32xf32>
    %47 = arith.truncf %46 : vector<256x32xf32> to vector<256x32xbf16>
    %c0_50 = arith.constant 0 : index
    %c0_51 = arith.constant 0 : index
    %48 = vector.load %arg6[%c0_50, %c0_51] : memref<32x32xbf16, #tpu.memory_space<vmem>>, vector<32x32xbf16>
    %cst_52 = arith.constant dense<0.000000e+00> : vector<256x32xf32>
    %49 = tpu.matmul %47, %48, %cst_52 {dimension_numbers = #tpu.dot_dimension_numbers<[1], [0], [0], [1], [0, 0, 1, 1], [], []>} : vector<256x32xbf16>, vector<32x32xbf16>, vector<256x32xf32> -> vector<256x32xf32>
    %c0_53 = arith.constant 0 : index
    %c0_54 = arith.constant 0 : index
    %50 = vector.load %arg7[%c0_53, %c0_54] : memref<1x32xf32, #tpu.memory_space<vmem>>, vector<1x32xf32>
    %51 = vector.broadcast %50 : vector<1x32xf32> to vector<256x32xf32>
    %52 = arith.addf %49, %51 : vector<256x32xf32>
    %53 = arith.extf %2 : vector<256x32xbf16> to vector<256x32xf32>
    %54 = arith.addf %52, %53 : vector<256x32xf32>
    %cst_55 = arith.constant 0.000000e+00 : f32
    %55 = vector.broadcast %cst_55 : f32 to vector<256x32xf32>
    %56 = arith.maximumf %54, %55 : vector<256x32xf32>
    %57 = arith.truncf %56 : vector<256x32xf32> to vector<256x32xbf16>
    %58 = vector.shape_cast %57 : vector<256x32xbf16> to vector<16x16x32xbf16>
    %c0_56 = arith.constant 0 : index
    %c0_57 = arith.constant 0 : index
    %c0_58 = arith.constant 0 : index
    %c0_59 = arith.constant 0 : index
    %59 = vector.load %arg8[%c0_56, %c0_57, %c0_58, %c0_59] : memref<1x16x16x32xbf16, #tpu.memory_space<vmem>>, vector<1x16x16x32xbf16>
    %60 = vector.shape_cast %59 : vector<1x16x16x32xbf16> to vector<16x16x32xbf16>
    %61 = vector.shape_cast %58 : vector<16x16x32xbf16> to vector<1x16x16x32xbf16>
    tpu.vector_store %arg8[%c0_56, %c0_57, %c0_58, %c0_59], %61 {strides = array<i32>} : memref<1x16x16x32xbf16, #tpu.memory_space<vmem>>, vector<1x16x16x32xbf16>,
    return
  }
  func.func @transform_0(%arg0: i32) -> (i32, i32, i32, i32) {
    %c0_i32 = arith.constant 0 : i32
    %c0_i32_0 = arith.constant 0 : i32
    %c0_i32_1 = arith.constant 0 : i32
    %c0_i32_2 = arith.constant 0 : i32
    return %arg0, %c0_i32, %c0_i32_0, %c0_i32_1 : i32, i32, i32, i32
  }
  func.func @transform_1(%arg0: i32) -> (i32, i32) {
    %c0_i32 = arith.constant 0 : i32
    %c0_i32_0 = arith.constant 0 : i32
    %c0_i32_1 = arith.constant 0 : i32
    return %c0_i32, %c0_i32_0 : i32, i32
  }
  func.func @transform_2(%arg0: i32) -> (i32, i32) {
    %c0_i32 = arith.constant 0 : i32
    %c0_i32_0 = arith.constant 0 : i32
    %c0_i32_1 = arith.constant 0 : i32
    return %c0_i32, %c0_i32_0 : i32, i32
  }
  func.func @transform_3(%arg0: i32) -> (i32, i32, i32) {
    %c0_i32 = arith.constant 0 : i32
    %c0_i32_0 = arith.constant 0 : i32
    %c0_i32_1 = arith.constant 0 : i32
    %c0_i32_2 = arith.constant 0 : i32
    return %c0_i32, %c0_i32_0, %c0_i32_1 : i32, i32, i32
  }
  func.func @transform_4(%arg0: i32) -> (i32, i32) {
    %c0_i32 = arith.constant 0 : i32
    %c0_i32_0 = arith.constant 0 : i32
    %c0_i32_1 = arith.constant 0 : i32
    return %c0_i32, %c0_i32_0 : i32, i32
  }
  func.func @transform_5(%arg0: i32) -> (i32, i32) {
    %c0_i32 = arith.constant 0 : i32
    %c0_i32_0 = arith.constant 0 : i32
    %c0_i32_1 = arith.constant 0 : i32
    return %c0_i32, %c0_i32_0 : i32, i32
  }
  func.func @transform_6(%arg0: i32) -> (i32, i32) {
    %c0_i32 = arith.constant 0 : i32
    %c0_i32_0 = arith.constant 0 : i32
    %c0_i32_1 = arith.constant 0 : i32
    return %c0_i32, %c0_i32_0 : i32, i32
  }
  func.func @transform_7(%arg0: i32) -> (i32, i32, i32, i32) {
    %c0_i32 = arith.constant 0 : i32
    %c0_i32_0 = arith.constant 0 : i32
    %c0_i32_1 = arith.constant 0 : i32
    %c0_i32_2 = arith.constant 0 : i32
    return %arg0, %c0_i32, %c0_i32_0, %c0_i32_1 : i32, i32, i32, i32
  }
}

</mosaic_0001>

<llo_original>
// kernel: resnext_bottleneck_forward.1
$region0: #{resnext_bottleneck_forward.1}
  #allocation0 [shape = 'u32[]', space=smem, size = 0x4, offset = 0x4, fixed_abs, tag = 'smem constant byte address 0x4 - core index']
  #allocation1 [shape = 'u32[144,128]{1,0:T(1,128)}', space=vmem, size = 0x12000, scoped, tag = 'internal scratch']
  #allocation2 [shape = 'bf16[18,16,96]{2,1,0:T(16,128)(2,1)}', space=vmem, size = 0x12000, scoped, tag = 'scratch operand']
  %s0 = inlined_call_operand.vmem [shape: bf16[2,16,16,32], index: 0, kind: input, shape index: {}]
  %s1 = inlined_call_operand.vmem [shape: bf16[32,32], index: 1, kind: input, shape index: {}]
  %s2 = inlined_call_operand.vmem [shape: f32[1,32], index: 2, kind: input, shape index: {}]
  %s3 = inlined_call_operand.vmem [shape: bf16[3,96,32], index: 3, kind: input, shape index: {}]
  %s4 = inlined_call_operand.vmem [shape: f32[1,32], index: 4, kind: input, shape index: {}]
  %s5 = inlined_call_operand.vmem [shape: bf16[32,32], index: 5, kind: input, shape index: {}]
  %s6 = inlined_call_operand.vmem [shape: f32[1,32], index: 6, kind: input, shape index: {}]
  %s7 = inlined_call_operand.vmem [shape: bf16[2,16,16,32], index: 7, kind: output, shape index: {}]
  %s8 = sld [smem:[#allocation0]]
  $region61: #{resnext_bottleneck_forward.1} parent=0
    _
  %s10 = ssub.s32 1, %s8
  %s11 = scalar_select 0, %s10, %s8
  loop: start=0, step=1, limit=4
  $region2: #{resnext_bottleneck_forward.1} parent=0 // loop_pre_header
    _
  $region3: #{resnext_bottleneck_forward.1} parent=0 // loop_header
    %s13 = sphi 0, %s17
    %p14 = scmp.ge.s32.totalorder %s13, 4
    %s23 = sphi 0, %s25
    %s26 = sphi 0, %s23
    %s27 = sphi 0, %s26
    %s43 = sphi 0, %s27
    %s47 = sphi 0, %s47
    %s49 = sphi 0, %s47
    %s50 = sphi 0, %s49
    %s64 = sphi 0, %s50
    %s68 = sphi 0, %s68
    %s70 = sphi 0, %s68
    %s71 = sphi 0, %s70
    %s85 = sphi 0, %s71
    %s89 = sphi 0, %s89
    %s91 = sphi 0, %s89
    %s92 = sphi 0, %s91
    %s106 = sphi 0, %s92
    %s110 = sphi 0, %s110
    %s112 = sphi 0, %s110
    %s113 = sphi 0, %s112
    %s127 = sphi 0, %s113
    %s131 = sphi 0, %s131
    %s133 = sphi 0, %s131
    %s134 = sphi 0, %s133
    %s148 = sphi 0, %s134
    %s152 = sphi 0, %s152
    %s154 = sphi 0, %s152
    %s155 = sphi 0, %s154
    %s169 = sphi 0, %s155
    %s175 = sphi 0, %s177
    %s178 = sphi 0, %s175
    %s179 = sphi 0, %s178
    %s195 = sphi 0, %s179
  $region4: #{resnext_bottleneck_forward.1} parent=0 // loop_header_branch
    %16 = sbr.rel (%p14) target = $region8
  $region5: #{resnext_bottleneck_forward.1} parent=0 // loop_body
    %s18 = ssub.s32 %s13, 1
    %s19 = ssub.s32 %s13, 2
    %s20 = sadd.s32 %s13, 1
    %s21 = ssub.s32 %s13, %s20
    %p22 = scmp.eq.s32.totalorder %s21, 0
    %s24 = sadd.s32 %s23, 1
    %s25 = scalar_select %p22, %s23, %s24
    %p28 = pneg %p22
    %p29 = scmp.eq.s32.totalorder %s13, 1
    %p30 = por %p28, %p29
    %p31 = scmp.ne.s32.totalorder %s23, %s26
    %p32 = scmp.eq.s32.totalorder %s13, 0
    %p33 = por %p31, %p32
    %p34 = scmp.ne.s32.totalorder %s23, %s26
    %p35 = scmp.eq.s32.totalorder %s18, 1
    %p36 = por %p34, %p35
    %p37 = scmp.ne.s32.totalorder %s26, %s27
    %p38 = scmp.eq.s32.totalorder %s18, 0
    %p39 = por %p37, %p38
    %p40 = scmp.ne.s32.totalorder %s26, %s27
    %p41 = scmp.eq.s32.totalorder %s19, 1
    %p42 = por %p40, %p41
    %p44 = scmp.ne.s32.totalorder %s27, %s43
    %p45 = scmp.eq.s32.totalorder %s19, 0
    %p46 = por %p44, %p45
    %s48 = sadd.s32 %s47, 1
    %p51 = scmp.eq.s32.totalorder %s13, 1
    %p52 = scmp.ne.s32.totalorder %s47, %s49
    %p53 = scmp.eq.s32.totalorder %s13, 0
    %p54 = por %p52, %p53
    %p55 = scmp.ne.s32.totalorder %s47, %s49
    %p56 = scmp.eq.s32.totalorder %s18, 1
    %p57 = por %p55, %p56
    %p58 = scmp.ne.s32.totalorder %s49, %s50
    %p59 = scmp.eq.s32.totalorder %s18, 0
    %p60 = por %p58, %p59
    %p61 = scmp.ne.s32.totalorder %s49, %s50
    %p62 = scmp.eq.s32.totalorder %s19, 1
    %p63 = por %p61, %p62
    %p65 = scmp.ne.s32.totalorder %s50, %s64
    %p66 = scmp.eq.s32.totalorder %s19, 0
    %p67 = por %p65, %p66
    %s69 = sadd.s32 %s68, 1
    %p72 = scmp.eq.s32.totalorder %s13, 1
    %p73 = scmp.ne.s32.totalorder %s68, %s70
    %p74 = scmp.eq.s32.totalorder %s13, 0
    %p75 = por %p73, %p74
    %p76 = scmp.ne.s32.totalorder %s68, %s70
    %p77 = scmp.eq.s32.totalorder %s18, 1
    %p78 = por %p76, %p77
    %p79 = scmp.ne.s32.totalorder %s70, %s71
    %p80 = scmp.eq.s32.totalorder %s18, 0
    %p81 = por %p79, %p80
    %p82 = scmp.ne.s32.totalorder %s70, %s71
    %p83 = scmp.eq.s32.totalorder %s19, 1
    %p84 = por %p82, %p83
    %p86 = scmp.ne.s32.totalorder %s71, %s85
    %p87 = scmp.eq.s32.totalorder %s19, 0
    %p88 = por %p86, %p87
    %s90 = sadd.s32 %s89, 1
    %p93 = scmp.eq.s32.totalorder %s13, 1
    %p94 = scmp.ne.s32.totalorder %s89, %s91
    %p95 = scmp.eq.s32.totalorder %s13, 0
    %p96 = por %p94, %p95
    %p97 = scmp.ne.s32.totalorder %s89, %s91
    %p98 = scmp.eq.s32.totalorder %s18, 1
    %p99 = por %p97, %p98
    %p100 = scmp.ne.s32.totalorder %s91, %s92
    %p101 = scmp.eq.s32.totalorder %s18, 0
    %p102 = por %p100, %p101
    %p103 = scmp.ne.s32.totalorder %s91, %s92
    %p104 = scmp.eq.s32.totalorder %s19, 1
    %p105 = por %p103, %p104
    %p107 = scmp.ne.s32.totalorder %s92, %s106
    %p108 = scmp.eq.s32.totalorder %s19, 0
    %p109 = por %p107, %p108
    %s111 = sadd.s32 %s110, 1
    %p114 = scmp.eq.s32.totalorder %s13, 1
    %p115 = scmp.ne.s32.totalorder %s110, %s112
    %p116 = scmp.eq.s32.totalorder %s13, 0
    %p117 = por %p115, %p116
    %p118 = scmp.ne.s32.totalorder %s110, %s112
    %p119 = scmp.eq.s32.totalorder %s18, 1
    %p120 = por %p118, %p119
    %p121 = scmp.ne.s32.totalorder %s112, %s113
    %p122 = scmp.eq.s32.totalorder %s18, 0
    %p123 = por %p121, %p122
    %p124 = scmp.ne.s32.totalorder %s112, %s113
    %p125 = scmp.eq.s32.totalorder %s19, 1
    %p126 = por %p124, %p125
    %p128 = scmp.ne.s32.totalorder %s113, %s127
    %p129 = scmp.eq.s32.totalorder %s19, 0
    %p130 = por %p128, %p129
    %s132 = sadd.s32 %s131, 1
    %p135 = scmp.eq.s32.totalorder %s13, 1
    %p136 = scmp.ne.s32.totalorder %s131, %s133
    %p137 = scmp.eq.s32.totalorder %s13, 0
    %p138 = por %p136, %p137
    %p139 = scmp.ne.s32.totalorder %s131, %s133
    %p140 = scmp.eq.s32.totalorder %s18, 1
    %p141 = por %p139, %p140
    %p142 = scmp.ne.s32.totalorder %s133, %s134
    %p143 = scmp.eq.s32.totalorder %s18, 0
    %p144 = por %p142, %p143
    %p145 = scmp.ne.s32.totalorder %s133, %s134
    %p146 = scmp.eq.s32.totalorder %s19, 1
    %p147 = por %p145, %p146
    %p149 = scmp.ne.s32.totalorder %s134, %s148
    %p150 = scmp.eq.s32.totalorder %s19, 0
    %p151 = por %p149, %p150
    %s153 = sadd.s32 %s152, 1
    %p156 = scmp.eq.s32.totalorder %s13, 1
    %p157 = scmp.ne.s32.totalorder %s152, %s154
    %p158 = scmp.eq.s32.totalorder %s13, 0
    %p159 = por %p157, %p158
    %p160 = scmp.ne.s32.totalorder %s152, %s154
    %p161 = scmp.eq.s32.totalorder %s18, 1
    %p162 = por %p160, %p161
    %p163 = scmp.ne.s32.totalorder %s154, %s155
    %p164 = scmp.eq.s32.totalorder %s18, 0
    %p165 = por %p163, %p164
    %p166 = scmp.ne.s32.totalorder %s154, %s155
    %p167 = scmp.eq.s32.totalorder %s19, 1
    %p168 = por %p166, %p167
    %p170 = scmp.ne.s32.totalorder %s155, %s169
    %p171 = scmp.eq.s32.totalorder %s19, 0
    %p172 = por %p170, %p171
    %s173 = ssub.s32 %s13, %s20
    %p174 = scmp.eq.s32.totalorder %s173, 0
    %s176 = sadd.s32 %s175, 1
    %s177 = scalar_select %p174, %s175, %s176
    %p180 = pneg %p174
    %p181 = scmp.eq.s32.totalorder %s13, 1
    %p182 = por %p180, %p181
    %p183 = scmp.ne.s32.totalorder %s175, %s178
    %p184 = scmp.eq.s32.totalorder %s13, 0
    %p185 = por %p183, %p184
    %p186 = scmp.ne.s32.totalorder %s175, %s178
    %p187 = scmp.eq.s32.totalorder %s18, 1
    %p188 = por %p186, %p187
    %p189 = scmp.ne.s32.totalorder %s178, %s179
    %p190 = scmp.eq.s32.totalorder %s18, 0
    %p191 = por %p189, %p190
    %p192 = scmp.ne.s32.totalorder %s178, %s179
    %p193 = scmp.eq.s32.totalorder %s19, 1
    %p194 = por %p192, %p193
    %p196 = scmp.ne.s32.totalorder %s179, %s195
    %p197 = scmp.eq.s32.totalorder %s19, 0
    %p198 = por %p196, %p197
    %p199 = scmp.le.s32.totalorder 1, %s13
    %p200 = scmp.lt.s32.totalorder %s13, 3
    %p201 = pnand %p199, %p200
    %p202 = pneg %p201
    // Predicated region
    $region9: #{resnext_bottleneck_forward.1} parent=5 // pred_check
      _
    $region10: #{resnext_bottleneck_forward.1} parent=5 // pred_check_branch
      %204 = sbr.rel (%p201) target = $region12
    $region11: #{resnext_bottleneck_forward.1} parent=5 // pred_region
      %s205 = ssub.s32 %s13, 1
      // Predicated region
      $region13: #{resnext_bottleneck_forward.1} parent=11 // pred_check
        %p206 = pneg %p60
      $region14: #{resnext_bottleneck_forward.1} parent=11 // pred_check_branch
        %208 = sbr.rel (%p206) target = $region16
      $region15: #{resnext_bottleneck_forward.1} parent=11 // pred_region
        _
      $region16: #{resnext_bottleneck_forward.1} parent=11 // pred_fallthru
        _
      // Predicated region
      $region17: #{resnext_bottleneck_forward.1} parent=11 // pred_check
        %p209 = pneg %p81
      $region18: #{resnext_bottleneck_forward.1} parent=11 // pred_check_branch
        %211 = sbr.rel (%p209) target = $region20
      $region19: #{resnext_bottleneck_forward.1} parent=11 // pred_region
        _
      $region20: #{resnext_bottleneck_forward.1} parent=11 // pred_fallthru
        _
      // Predicated region
      $region21: #{resnext_bottleneck_forward.1} parent=11 // pred_check
        %p212 = pneg %p102
      $region22: #{resnext_bottleneck_forward.1} parent=11 // pred_check_branch
        %214 = sbr.rel (%p212) target = $region24
      $region23: #{resnext_bottleneck_forward.1} parent=11 // pred_region
        _
      $region24: #{resnext_bottleneck_forward.1} parent=11 // pred_fallthru
        _
      // Predicated region
      $region25: #{resnext_bottleneck_forward.1} parent=11 // pred_check
        %p215 = pneg %p123
      $region26: #{resnext_bottleneck_forward.1} parent=11 // pred_check_branch
        %217 = sbr.rel (%p215) target = $region28
      $region27: #{resnext_bottleneck_forward.1} parent=11 // pred_region
        _
      $region28: #{resnext_bottleneck_forward.1} parent=11 // pred_fallthru
        _
      // Predicated region
      $region29: #{resnext_bottleneck_forward.1} parent=11 // pred_check
        %p218 = pneg %p144
      $region30: #{resnext_bottleneck_forward.1} parent=11 // pred_check_branch
        %220 = sbr.rel (%p218) target = $region32
      $region31: #{resnext_bottleneck_forward.1} parent=11 // pred_region
        _
      $region32: #{resnext_bottleneck_forward.1} parent=11 // pred_fallthru
        _
      // Predicated region
      $region33: #{resnext_bottleneck_forward.1} parent=11 // pred_check
        %p221 = pneg %p165
      $region34: #{resnext_bottleneck_forward.1} parent=11 // pred_check_branch
        %223 = sbr.rel (%p221) target = $region36
      $region35: #{resnext_bottleneck_forward.1} parent=11 // pred_region
        _
      $region36: #{resnext_bottleneck_forward.1} parent=11 // pred_fallthru
        _
    $region12: #{resnext_bottleneck_forward.1} parent=5 // pred_fallthru
      _
    %p224 = scmp.lt.s32.totalorder %s13, 2
    // Predicated region
    $region37: #{resnext_bottleneck_forward.1} parent=5 // pred_check
      %p225 = pneg %p224
    $region38: #{resnext_bottleneck_forward.1} parent=5 // pred_check_branch
      %227 = sbr.rel (%p225) target = $region40
    $region39: #{resnext_bottleneck_forward.1} parent=5 // pred_region
      // Predicated region
      $region41: #{resnext_bottleneck_forward.1} parent=39 // pred_check
        %p228 = pneg %p33
      $region42: #{resnext_bottleneck_forward.1} parent=39 // pred_check_branch
        %230 = sbr.rel (%p228) target = $region44
      $region43: #{resnext_bottleneck_forward.1} parent=39 // pred_region
        %p231 = scmp.lt.s32.totalorder %s13, 1
        %s232 = scalar_select %p231, %s13, 1
        %s233 = smul.addr %s232, 32
        %s234 = smul.addr %s233, 4
        %s235 = scalar_lea.vmem %s0, %s234
      $region44: #{resnext_bottleneck_forward.1} parent=39 // pred_fallthru
        _
    $region40: #{resnext_bottleneck_forward.1} parent=5 // pred_fallthru
      _
    %p236 = scmp.le.s32.totalorder 1, %s13
    %p237 = scmp.lt.s32.totalorder %s13, 3
    %p238 = pnand %p236, %p237
    %p239 = pneg %p238
    // Predicated region
    $region45: #{resnext_bottleneck_forward.1} parent=5 // pred_check
      _
    $region46: #{resnext_bottleneck_forward.1} parent=5 // pred_check_branch
      %241 = sbr.rel (%p238) target = $region48
    $region47: #{resnext_bottleneck_forward.1} parent=5 // pred_region
      %s242 = ssub.s32 %s13, 1
      %p243 = scmp.lt.s32.totalorder %s18, 1
      %s244 = scalar_select %p243, %s18, 1
      %s245 = smul.addr %s244, 32
      %s246 = smul.addr %s245, 4
      %s247 = scalar_lea.vmem %s0, %s246
      %p248 = pneg %p39
      %p249 = pneg %p36
      %p250 = pneg %p60
      %p251 = pneg %p57
      %p252 = pneg %p81
      %p253 = pneg %p78
      %p254 = pneg %p102
      %p255 = pneg %p99
      %p256 = pneg %p123
      %p257 = pneg %p120
      %p258 = pneg %p144
      %p259 = pneg %p141
      %p260 = pneg %p165
      %p261 = pneg %p162
      %p262 = pneg %p191
      %p263 = pneg %p188
      %p264 = scmp.lt.s32.totalorder %s18, 1
      %s265 = scalar_select %p264, %s18, 1
      %s266 = smul.addr %s265, 32
      %s267 = smul.addr %s266, 4
      %s268 = scalar_lea.vmem %s7, %s267
      %p269 = scmp.lt.s32.totalorder %s18, 1
      %s270 = scalar_select %p269, %s18, 1
      %s271 = smul.addr %s270, 32
      %s272 = smul.addr %s271, 4
      %s273 = scalar_lea.vmem %s0, %s272
      %p274 = scmp.lt.s32.totalorder %s18, 1
      %s275 = scalar_select %p274, %s18, 1
      %s276 = smul.addr %s275, 32
      %s277 = smul.addr %s276, 4
      %s278 = scalar_lea.vmem %s7, %s277
      %v280 = vld [vmem:[%s273] sm:$0xf]
      %v281 = vld [vmem:[%s273 + $0x4] sm:$0xf]
      %v282 = vld [vmem:[%s273 + $0x8] sm:$0xf]
      %v283 = vld [vmem:[%s273 + $0xc] sm:$0xf]
      %v284 = vld [vmem:[%s273 + $0x10] sm:$0xf]
      %v285 = vld [vmem:[%s273 + $0x14] sm:$0xf]
      %v286 = vld [vmem:[%s273 + $0x18] sm:$0xf]
      %v287 = vld [vmem:[%s273 + $0x1c] sm:$0xf]
      %v288 = vld [vmem:[%s273 + $0x20] sm:$0xf]
      %v289 = vld [vmem:[%s273 + $0x24] sm:$0xf]
      %v290 = vld [vmem:[%s273 + $0x28] sm:$0xf]
      %v291 = vld [vmem:[%s273 + $0x2c] sm:$0xf]
      %v292 = vld [vmem:[%s273 + $0x30] sm:$0xf]
      %v293 = vld [vmem:[%s273 + $0x34] sm:$0xf]
      %v294 = vld [vmem:[%s273 + $0x38] sm:$0xf]
      %v295 = vld [vmem:[%s273 + $0x3c] sm:$0xf]
      %v296 = vld [vmem:[%s273 + $0x40] sm:$0xf]
      %v297 = vld [vmem:[%s273 + $0x44] sm:$0xf]
      %v298 = vld [vmem:[%s273 + $0x48] sm:$0xf]
      %v299 = vld [vmem:[%s273 + $0x4c] sm:$0xf]
      %v300 = vld [vmem:[%s273 + $0x50] sm:$0xf]
      %v301 = vld [vmem:[%s273 + $0x54] sm:$0xf]
      %v302 = vld [vmem:[%s273 + $0x58] sm:$0xf]
      %v303 = vld [vmem:[%s273 + $0x5c] sm:$0xf]
      %v304 = vld [vmem:[%s273 + $0x60] sm:$0xf]
      %v305 = vld [vmem:[%s273 + $0x64] sm:$0xf]
      %v306 = vld [vmem:[%s273 + $0x68] sm:$0xf]
      %v307 = vld [vmem:[%s273 + $0x6c] sm:$0xf]
      %v308 = vld [vmem:[%s273 + $0x70] sm:$0xf]
      %v309 = vld [vmem:[%s273 + $0x74] sm:$0xf]
      %v310 = vld [vmem:[%s273 + $0x78] sm:$0xf]
      %v311 = vld [vmem:[%s273 + $0x7c] sm:$0xf]
      %v312 = vld [vmem:[%s1] sm:$0xf]
      %v313 = vld [vmem:[%s1 + $0x4] sm:$0xf]
      %v314 = vld [vmem:[%s1 + $0x8] sm:$0xf]
      %v315 = vld [vmem:[%s1 + $0xc] sm:$0xf]
      %v316 = vld [vmem:[%s2] sm:$0x1]
      %v318 = vlaneseq
      %v319 = vshrl.u32 %v318, 7
      %v320 = vsub.s32 0, %v319
      %v321 = vrot.slane %v316, %v320
      %v355 = vunpack.c.l.b16 %v280
      %v356 = vunpack.c.l.b16 %v281
      %v357 = vunpack.c.l.b16 %v282
      %v358 = vunpack.c.l.b16 %v283
      %v359 = vunpack.c.l.b16 %v284
      %v360 = vunpack.c.l.b16 %v285
      %v361 = vunpack.c.l.b16 %v286
      %v362 = vunpack.c.l.b16 %v287
      %v363 = vunpack.c.l.b16 %v288
      %v364 = vunpack.c.l.b16 %v289
      %v365 = vunpack.c.l.b16 %v290
      %v366 = vunpack.c.l.b16 %v291
      %v367 = vunpack.c.l.b16 %v292
      %v368 = vunpack.c.l.b16 %v293
      %v369 = vunpack.c.l.b16 %v294
      %v370 = vunpack.c.l.b16 %v295
      %v371 = vunpack.c.l.b16 %v296
      %v372 = vunpack.c.l.b16 %v297
      %v373 = vunpack.c.l.b16 %v298
      %v374 = vunpack.c.l.b16 %v299
      %v375 = vunpack.c.l.b16 %v300
      %v376 = vunpack.c.l.b16 %v301
      %v377 = vunpack.c.l.b16 %v302
      %v378 = vunpack.c.l.b16 %v303
      %v379 = vunpack.c.l.b16 %v304
      %v380 = vunpack.c.l.b16 %v305
      %v381 = vunpack.c.l.b16 %v306
      %v382 = vunpack.c.l.b16 %v307
      %v383 = vunpack.c.l.b16 %v308
      %v384 = vunpack.c.l.b16 %v309
      %v385 = vunpack.c.l.b16 %v310
      %v386 = vunpack.c.l.b16 %v311
      %v387 = vpack.c.b16 %v356, %v355
      %v388 = vpack.c.b16 %v358, %v357
      %v389 = vpack.c.b16 %v360, %v359
      %v390 = vpack.c.b16 %v362, %v361
      %v391 = vpack.c.b16 %v364, %v363
      %v392 = vpack.c.b16 %v366, %v365
      %v393 = vpack.c.b16 %v368, %v367
      %v394 = vpack.c.b16 %v370, %v369
      %v395 = vpack.c.b16 %v372, %v371
      %v396 = vpack.c.b16 %v374, %v373
      %v397 = vpack.c.b16 %v376, %v375
      %v398 = vpack.c.b16 %v378, %v377
      %v399 = vpack.c.b16 %v380, %v379
      %v400 = vpack.c.b16 %v382, %v381
      %v401 = vpack.c.b16 %v384, %v383
      %v402 = vpack.c.b16 %v386, %v385
      %v407 = vunpack.c.l.b16 %v312
      %v408 = vunpack.c.l.b16 %v313
      %v409 = vunpack.c.l.b16 %v314
      %v410 = vunpack.c.l.b16 %v315
      %v411 = vpack.c.b16 %v408, %v407
      %v412 = vpack.c.b16 %v410, %v409
      %vm415 = vcmask 261120
      %v417 = vsel %vm415, %v387, 0
      %v420 = vsel %vm415, %v388, 0
      %v423 = vsel %vm415, %v389, 0
      %v426 = vsel %vm415, %v390, 0
      %v429 = vsel %vm415, %v391, 0
      %v432 = vsel %vm415, %v392, 0
      %v435 = vsel %vm415, %v393, 0
      %v438 = vsel %vm415, %v394, 0
      %v441 = vsel %vm415, %v395, 0
      %v444 = vsel %vm415, %v396, 0
      %v447 = vsel %vm415, %v397, 0
      %v450 = vsel %vm415, %v398, 0
      %v453 = vsel %vm415, %v399, 0
      %v456 = vsel %vm415, %v400, 0
      %v459 = vsel %vm415, %v401, 0
      %v462 = vsel %vm415, %v402, 0
      %464 = vmatprep.subr.bf16.mxu0 0
      %465 = vmatpush1.bf16.msra.mxu0 %v411
      %466 = vmatprep.subr.bf16.mxu0 0
      %467 = vmatpush1.bf16.msra.mxu0 %v412
      %468 = vmatprep.subr.bf16.mxu0 0
      %469 = vmatpush1.bf16.msra.mxu0 0
      %470 = vmatprep.subr.bf16.mxu0 0
      %471 = vmatpush1.bf16.msra.mxu0 0
      %472 = vmatprep.subr.bf16.mxu0 0
      %473 = vmatpush1.bf16.msra.mxu0 0
      %474 = vmatprep.subr.bf16.mxu0 0
      %475 = vmatpush1.bf16.msra.mxu0 0
      %476 = vmatprep.subr.bf16.mxu0 0
      %477 = vmatpush1.bf16.msra.mxu0 0
      %478 = vmatprep.subr.bf16.mxu0 0
      %479 = vmatpush1.bf16.msra.mxu0 0
      %480 = vmatprep.subr.bf16.mxu0 0
      %481 = vmatpush1.bf16.msra.mxu0 0
      %482 = vmatprep.subr.bf16.mxu0 0
      %483 = vmatpush1.bf16.msra.mxu0 0
      %484 = vmatprep.subr.bf16.mxu0 0
      %485 = vmatpush1.bf16.msra.mxu0 0
      %486 = vmatprep.subr.bf16.mxu0 0
      %487 = vmatpush1.bf16.msra.mxu0 0
      %488 = vmatprep.subr.bf16.mxu0 0
      %489 = vmatpush1.bf16.msra.mxu0 0
      %490 = vmatprep.subr.bf16.mxu0 0
      %491 = vmatpush1.bf16.msra.mxu0 0
      %492 = vmatprep.subr.bf16.mxu0 0
      %493 = vmatpush1.bf16.msra.mxu0 0
      %494 = vmatprep.subr.bf16.mxu0 0
      %495 = vmatpush1.bf16.msra.mxu0 0
      %496 = vmatprep.mubr.bf16.mxu0 0
      %497 = vmatmul.mubr.bf16.gmra.mrb[0].mxu0 %v417
      %v498 = vpop.f32.mrb[0].mxu0
      %v499 = vadd.f32 %v321, %v498
      %v500 = vpop.f32.mrb[0].mxu0
      %v501 = vpop.f32.mrb[0].mxu0
      %v502 = vadd.f32 %v321, %v501
      %v503 = vpop.f32.mrb[0].mxu0
      %504 = vmatprep.mubr.bf16.mxu0 0
      %505 = vmatmul.mubr.bf16.gmra.mrb[0].mxu0 %v420
      %v506 = vpop.f32.mrb[0].mxu0
      %v507 = vadd.f32 %v321, %v506
      %v508 = vpop.f32.mrb[0].mxu0
      %v509 = vpop.f32.mrb[0].mxu0
      %v510 = vadd.f32 %v321, %v509
      %v511 = vpop.f32.mrb[0].mxu0
      %512 = vmatprep.mubr.bf16.mxu0 0
      %513 = vmatmul.mubr.bf16.gmra.mrb[0].mxu0 %v423
      %v514 = vpop.f32.mrb[0].mxu0
      %v515 = vadd.f32 %v321, %v514
      %v516 = vpop.f32.mrb[0].mxu0
      %v517 = vpop.f32.mrb[0].mxu0
      %v518 = vadd.f32 %v321, %v517
      %v519 = vpop.f32.mrb[0].mxu0
      %520 = vmatprep.mubr.bf16.mxu0 0
      %521 = vmatmul.mubr.bf16.gmra.mrb[0].mxu0 %v426
      %v522 = vpop.f32.mrb[0].mxu0
      %v523 = vadd.f32 %v321, %v522
      %v524 = vpop.f32.mrb[0].mxu0
      %v525 = vpop.f32.mrb[0].mxu0
      %v526 = vadd.f32 %v321, %v525
      %v527 = vpop.f32.mrb[0].mxu0
      %528 = vmatprep.mubr.bf16.mxu0 0
      %529 = vmatmul.mubr.bf16.gmra.mrb[0].mxu0 %v429
      %v530 = vpop.f32.mrb[0].mxu0
      %v531 = vadd.f32 %v321, %v530
      %v532 = vpop.f32.mrb[0].mxu0
      %v533 = vpop.f32.mrb[0].mxu0
      %v534 = vadd.f32 %v321, %v533
      %v535 = vpop.f32.mrb[0].mxu0
      %536 = vmatprep.mubr.bf16.mxu0 0
      %537 = vmatmul.mubr.bf16.gmra.mrb[0].mxu0 %v432
      %v538 = vpop.f32.mrb[0].mxu0
      %v539 = vadd.f32 %v321, %v538
      %v540 = vpop.f32.mrb[0].mxu0
      %v541 = vpop.f32.mrb[0].mxu0
      %v542 = vadd.f32 %v321, %v541
      %v543 = vpop.f32.mrb[0].mxu0
      %544 = vmatprep.mubr.bf16.mxu0 0
      %545 = vmatmul.mubr.bf16.gmra.mrb[0].mxu0 %v435
      %v546 = vpop.f32.mrb[0].mxu0
      %v547 = vadd.f32 %v321, %v546
      %v548 = vpop.f32.mrb[0].mxu0
      %v549 = vpop.f32.mrb[0].mxu0
      %v550 = vadd.f32 %v321, %v549
      %v551 = vpop.f32.mrb[0].mxu0
      %552 = vmatprep.mubr.bf16.mxu0 0
      %553 = vmatmul.mubr.bf16.gmra.mrb[0].mxu0 %v438
      %v554 = vpop.f32.mrb[0].mxu0
      %v555 = vadd.f32 %v321, %v554
      %v556 = vpop.f32.mrb[0].mxu0
      %v557 = vpop.f32.mrb[0].mxu0
      %v558 = vadd.f32 %v321, %v557
      %v559 = vpop.f32.mrb[0].mxu0
      %560 = vmatprep.mubr.bf16.mxu0 0
      %561 = vmatmul.mubr.bf16.gmra.mrb[0].mxu0 %v441
      %v562 = vpop.f32.mrb[0].mxu0
      %v563 = vadd.f32 %v321, %v562
      %v564 = vpop.f32.mrb[0].mxu0
      %v565 = vpop.f32.mrb[0].mxu0
      %v566 = vadd.f32 %v321, %v565
      %v567 = vpop.f32.mrb[0].mxu0
      %568 = vmatprep.mubr.bf16.mxu0 0
      %569 = vmatmul.mubr.bf16.gmra.mrb[0].mxu0 %v444
      %v570 = vpop.f32.mrb[0].mxu0
      %v571 = vadd.f32 %v321, %v570
      %v572 = vpop.f32.mrb[0].mxu0
      %v573 = vpop.f32.mrb[0].mxu0
      %v574 = vadd.f32 %v321, %v573
      %v575 = vpop.f32.mrb[0].mxu0
      %576 = vmatprep.mubr.bf16.mxu0 0
      %577 = vmatmul.mubr.bf16.gmra.mrb[0].mxu0 %v447
      %v578 = vpop.f32.mrb[0].mxu0
      %v579 = vadd.f32 %v321, %v578
      %v580 = vpop.f32.mrb[0].mxu0
      %v581 = vpop.f32.mrb[0].mxu0
      %v582 = vadd.f32 %v321, %v581
      %v583 = vpop.f32.mrb[0].mxu0
      %584 = vmatprep.mubr.bf16.mxu0 0
      %585 = vmatmul.mubr.bf16.gmra.mrb[0].mxu0 %v450
      %v586 = vpop.f32.mrb[0].mxu0
      %v587 = vadd.f32 %v321, %v586
      %v588 = vpop.f32.mrb[0].mxu0
      %v589 = vpop.f32.mrb[0].mxu0
      %v590 = vadd.f32 %v321, %v589
      %v591 = vpop.f32.mrb[0].mxu0
      %592 = vmatprep.mubr.bf16.mxu0 0
      %593 = vmatmul.mubr.bf16.gmra.mrb[0].mxu0 %v453
      %v594 = vpop.f32.mrb[0].mxu0
      %v595 = vadd.f32 %v321, %v594
      %v596 = vpop.f32.mrb[0].mxu0
      %v597 = vpop.f32.mrb[0].mxu0
      %v598 = vadd.f32 %v321, %v597
      %v599 = vpop.f32.mrb[0].mxu0
      %600 = vmatprep.mubr.bf16.mxu0 0
      %601 = vmatmul.mubr.bf16.gmra.mrb[0].mxu0 %v456
      %v602 = vpop.f32.mrb[0].mxu0
      %v603 = vadd.f32 %v321, %v602
      %v604 = vpop.f32.mrb[0].mxu0
      %v605 = vpop.f32.mrb[0].mxu0
      %v606 = vadd.f32 %v321, %v605
      %v607 = vpop.f32.mrb[0].mxu0
      %608 = vmatprep.mubr.bf16.mxu0 0
      %609 = vmatmul.mubr.bf16.gmra.mrb[0].mxu0 %v459
      %v610 = vpop.f32.mrb[0].mxu0
      %v611 = vadd.f32 %v321, %v610
      %v612 = vpop.f32.mrb[0].mxu0
      %v613 = vpop.f32.mrb[0].mxu0
      %v614 = vadd.f32 %v321, %v613
      %v615 = vpop.f32.mrb[0].mxu0
      %616 = vmatprep.mubr.bf16.mxu0 0
      %617 = vmatmul.mubr.bf16.gmra.mrb[0].mxu0 %v462
      %v618 = vpop.f32.mrb[0].mxu0
      %v619 = vadd.f32 %v321, %v618
      %v620 = vpop.f32.mrb[0].mxu0
      %v621 = vpop.f32.mrb[0].mxu0
      %v622 = vadd.f32 %v321, %v621
      %v623 = vpop.f32.mrb[0].mxu0
      %624 = vdwg.mxu0
      %v625 = vmax.f32 %v499, 0.0
      %v626 = vmax.f32 %v502, 0.0
      %v627 = vmax.f32 %v507, 0.0
      %v628 = vmax.f32 %v510, 0.0
      %v629 = vmax.f32 %v515, 0.0
      %v630 = vmax.f32 %v518, 0.0
      %v631 = vmax.f32 %v523, 0.0
      %v632 = vmax.f32 %v526, 0.0
      %v633 = vmax.f32 %v531, 0.0
      %v634 = vmax.f32 %v534, 0.0
      %v635 = vmax.f32 %v539, 0.0
      %v636 = vmax.f32 %v542, 0.0
      %v637 = vmax.f32 %v547, 0.0
      %v638 = vmax.f32 %v550, 0.0
      %v639 = vmax.f32 %v555, 0.0
      %v640 = vmax.f32 %v558, 0.0
      %v641 = vmax.f32 %v563, 0.0
      %v642 = vmax.f32 %v566, 0.0
      %v643 = vmax.f32 %v571, 0.0
      %v644 = vmax.f32 %v574, 0.0
      %v645 = vmax.f32 %v579, 0.0
      %v646 = vmax.f32 %v582, 0.0
      %v647 = vmax.f32 %v587, 0.0
      %v648 = vmax.f32 %v590, 0.0
      %v649 = vmax.f32 %v595, 0.0
      %v650 = vmax.f32 %v598, 0.0
      %v651 = vmax.f32 %v603, 0.0
      %v652 = vmax.f32 %v606, 0.0
      %v653 = vmax.f32 %v611, 0.0
      %v654 = vmax.f32 %v614, 0.0
      %v655 = vmax.f32 %v619, 0.0
      %v656 = vmax.f32 %v622, 0.0
      %v657 = vpack.c.bf16 %v626, %v625
      %v658 = vpack.c.bf16 %v628, %v627
      %v659 = vpack.c.bf16 %v630, %v629
      %v660 = vpack.c.bf16 %v632, %v631
      %v661 = vpack.c.bf16 %v634, %v633
      %v662 = vpack.c.bf16 %v636, %v635
      %v663 = vpack.c.bf16 %v638, %v637
      %v664 = vpack.c.bf16 %v640, %v639
      %v665 = vpack.c.bf16 %v642, %v641
      %v666 = vpack.c.bf16 %v644, %v643
      %v667 = vpack.c.bf16 %v646, %v645
      %v668 = vpack.c.bf16 %v648, %v647
      %v669 = vpack.c.bf16 %v650, %v649
      %v670 = vpack.c.bf16 %v652, %v651
      %v671 = vpack.c.bf16 %v654, %v653
      %v672 = vpack.c.bf16 %v656, %v655
      %vm673 = vcmask 785408
      %674 = vst.msk [vmem:[#allocation2] sm:$0xff] %vm673, 0
      %s675 = scalar_lea.vmem [#allocation2], 136
      %676 = vst.msk [vmem:[%s675] sm:$0xff] %vm673, 0
      %s677 = scalar_lea.vmem [#allocation2], 8
      %vm678 = vcmask 253952
      %vm679 = vsmask.f32 256
      %vm680 = vmand %vm678, %vm679
      %v681 = vld [vmem:[%s677] sm:$0x1]
      %v682 = vsel %vm680, 0, %v681
      %683 = vst [vmem:[%s677] sm:$0x1] %v682
      %v684 = vld [vmem:[%s677 + $0x8] sm:$0x1]
      %v685 = vsel %vm680, 0, %v684
      %686 = vst [vmem:[%s677 + $0x8] sm:$0x1] %v685
      %v687 = vld [vmem:[%s677 + $0x10] sm:$0x1]
      %v688 = vsel %vm680, 0, %v687
      %689 = vst [vmem:[%s677 + $0x10] sm:$0x1] %v688
      %v690 = vld [vmem:[%s677 + $0x18] sm:$0x1]
      %v691 = vsel %vm680, 0, %v690
      %692 = vst [vmem:[%s677 + $0x18] sm:$0x1] %v691
      %v693 = vld [vmem:[%s677 + $0x20] sm:$0x1]
      %v694 = vsel %vm680, 0, %v693
      %695 = vst [vmem:[%s677 + $0x20] sm:$0x1] %v694
      %v696 = vld [vmem:[%s677 + $0x28] sm:$0x1]
      %v697 = vsel %vm680, 0, %v696
      %698 = vst [vmem:[%s677 + $0x28] sm:$0x1] %v697
      %v699 = vld [vmem:[%s677 + $0x30] sm:$0x1]
      %v700 = vsel %vm680, 0, %v699
      %701 = vst [vmem:[%s677 + $0x30] sm:$0x1] %v700
      %v702 = vld [vmem:[%s677 + $0x38] sm:$0x1]
      %v703 = vsel %vm680, 0, %v702
      %704 = vst [vmem:[%s677 + $0x38] sm:$0x1] %v703
      %v705 = vld [vmem:[%s677 + $0x40] sm:$0x1]
      %v706 = vsel %vm680, 0, %v705
      %707 = vst [vmem:[%s677 + $0x40] sm:$0x1] %v706
      %v708 = vld [vmem:[%s677 + $0x48] sm:$0x1]
      %v709 = vsel %vm680, 0, %v708
      %710 = vst [vmem:[%s677 + $0x48] sm:$0x1] %v709
      %v711 = vld [vmem:[%s677 + $0x50] sm:$0x1]
      %v712 = vsel %vm680, 0, %v711
      %713 = vst [vmem:[%s677 + $0x50] sm:$0x1] %v712
      %v714 = vld [vmem:[%s677 + $0x58] sm:$0x1]
      %v715 = vsel %vm680, 0, %v714
      %716 = vst [vmem:[%s677 + $0x58] sm:$0x1] %v715
      %v717 = vld [vmem:[%s677 + $0x60] sm:$0x1]
      %v718 = vsel %vm680, 0, %v717
      %719 = vst [vmem:[%s677 + $0x60] sm:$0x1] %v718
      %v720 = vld [vmem:[%s677 + $0x68] sm:$0x1]
      %v721 = vsel %vm680, 0, %v720
      %722 = vst [vmem:[%s677 + $0x68] sm:$0x1] %v721
      %v723 = vld [vmem:[%s677 + $0x70] sm:$0x1]
      %v724 = vsel %vm680, 0, %v723
      %725 = vst [vmem:[%s677 + $0x70] sm:$0x1] %v724
      %v726 = vld [vmem:[%s677 + $0x78] sm:$0x1]
      %v727 = vsel %vm680, 0, %v726
      %728 = vst [vmem:[%s677 + $0x78] sm:$0x1] %v727
      %vm729 = vcmask 785927
      %vm730 = vsmask.f32 7966
      %vm731 = vmand %vm729, %vm730
      %v732 = vld [vmem:[%s677] sm:$0x80]
      %v733 = vsel %vm731, 0, %v732
      %734 = vst [vmem:[%s677] sm:$0x80] %v733
      %v735 = vld [vmem:[%s677 + $0x8] sm:$0x80]
      %v736 = vsel %vm731, 0, %v735
      %737 = vst [vmem:[%s677 + $0x8] sm:$0x80] %v736
      %v738 = vld [vmem:[%s677 + $0x10] sm:$0x80]
      %v739 = vsel %vm731, 0, %v738
      %740 = vst [vmem:[%s677 + $0x10] sm:$0x80] %v739
      %v741 = vld [vmem:[%s677 + $0x18] sm:$0x80]
      %v742 = vsel %vm731, 0, %v741
      %743 = vst [vmem:[%s677 + $0x18] sm:$0x80] %v742
      %v744 = vld [vmem:[%s677 + $0x20] sm:$0x80]
      %v745 = vsel %vm731, 0, %v744
      %746 = vst [vmem:[%s677 + $0x20] sm:$0x80] %v745
      %v747 = vld [vmem:[%s677 + $0x28] sm:$0x80]
      %v748 = vsel %vm731, 0, %v747
      %749 = vst [vmem:[%s677 + $0x28] sm:$0x80] %v748
      %v750 = vld [vmem:[%s677 + $0x30] sm:$0x80]
      %v751 = vsel %vm731, 0, %v750
      %752 = vst [vmem:[%s677 + $0x30] sm:$0x80] %v751
      %v753 = vld [vmem:[%s677 + $0x38] sm:$0x80]
      %v754 = vsel %vm731, 0, %v753
      %755 = vst [vmem:[%s677 + $0x38] sm:$0x80] %v754
      %v756 = vld [vmem:[%s677 + $0x40] sm:$0x80]
      %v757 = vsel %vm731, 0, %v756
      %758 = vst [vmem:[%s677 + $0x40] sm:$0x80] %v757
      %v759 = vld [vmem:[%s677 + $0x48] sm:$0x80]
      %v760 = vsel %vm731, 0, %v759
      %761 = vst [vmem:[%s677 + $0x48] sm:$0x80] %v760
      %v762 = vld [vmem:[%s677 + $0x50] sm:$0x80]
      %v763 = vsel %vm731, 0, %v762
      %764 = vst [vmem:[%s677 + $0x50] sm:$0x80] %v763
      %v765 = vld [vmem:[%s677 + $0x58] sm:$0x80]
      %v766 = vsel %vm731, 0, %v765
      %767 = vst [vmem:[%s677 + $0x58] sm:$0x80] %v766
      %v768 = vld [vmem:[%s677 + $0x60] sm:$0x80]
      %v769 = vsel %vm731, 0, %v768
      %770 = vst [vmem:[%s677 + $0x60] sm:$0x80] %v769
      %v771 = vld [vmem:[%s677 + $0x68] sm:$0x80]
      %v772 = vsel %vm731, 0, %v771
      %773 = vst [vmem:[%s677 + $0x68] sm:$0x80] %v772
      %v774 = vld [vmem:[%s677 + $0x70] sm:$0x80]
      %v775 = vsel %vm731, 0, %v774
      %776 = vst [vmem:[%s677 + $0x70] sm:$0x80] %v775
      %v777 = vld [vmem:[%s677 + $0x78] sm:$0x80]
      %v778 = vsel %vm731, 0, %v777
      %779 = vst [vmem:[%s677 + $0x78] sm:$0x80] %v778
      %796 = vrot.lane.b32.xlu0 %v657, 32
      %v797 = vpop.permute.xlu0 %796
      %798 = vrot.lane.b32.xlu0 %v658, 32
      %v799 = vpop.permute.xlu0 %798
      %800 = vrot.lane.b32.xlu0 %v659, 32
      %v801 = vpop.permute.xlu0 %800
      %802 = vrot.lane.b32.xlu0 %v660, 32
      %v803 = vpop.permute.xlu0 %802
      %804 = vrot.lane.b32.xlu0 %v661, 32
      %v805 = vpop.permute.xlu0 %804
      %806 = vrot.lane.b32.xlu0 %v662, 32
      %v807 = vpop.permute.xlu0 %806
      %808 = vrot.lane.b32.xlu0 %v663, 32
      %v809 = vpop.permute.xlu0 %808
      %810 = vrot.lane.b32.xlu0 %v664, 32
      %v811 = vpop.permute.xlu0 %810
      %812 = vrot.lane.b32.xlu0 %v665, 32
      %v813 = vpop.permute.xlu0 %812
      %814 = vrot.lane.b32.xlu0 %v666, 32
      %v815 = vpop.permute.xlu0 %814
      %816 = vrot.lane.b32.xlu0 %v667, 32
      %v817 = vpop.permute.xlu0 %816
      %818 = vrot.lane.b32.xlu0 %v668, 32
      %v819 = vpop.permute.xlu0 %818
      %820 = vrot.lane.b32.xlu0 %v669, 32
      %v821 = vpop.permute.xlu0 %820
      %822 = vrot.lane.b32.xlu0 %v670, 32
      %v823 = vpop.permute.xlu0 %822
      %824 = vrot.lane.b32.xlu0 %v671, 32
      %v825 = vpop.permute.xlu0 %824
      %826 = vrot.lane.b32.xlu0 %v672, 32
      %v827 = vpop.permute.xlu0 %826
      %vm844 = vcmask 523520
      %845 = vst.msk [vmem:[%s677] sm:$0xff] %vm844, %v797
      %846 = vst.msk [vmem:[%s677 + $0x8] sm:$0xff] %vm844, %v799
      %847 = vst.msk [vmem:[%s677 + $0x10] sm:$0xff] %vm844, %v801
      %848 = vst.msk [vmem:[%s677 + $0x18] sm:$0xff] %vm844, %v803
      %849 = vst.msk [vmem:[%s677 + $0x20] sm:$0xff] %vm844, %v805
      %850 = vst.msk [vmem:[%s677 + $0x28] sm:$0xff] %vm844, %v807
      %851 = vst.msk [vmem:[%s677 + $0x30] sm:$0xff] %vm844, %v809
      %852 = vst.msk [vmem:[%s677 + $0x38] sm:$0xff] %vm844, %v811
      %853 = vst.msk [vmem:[%s677 + $0x40] sm:$0xff] %vm844, %v813
      %854 = vst.msk [vmem:[%s677 + $0x48] sm:$0xff] %vm844, %v815
      %855 = vst.msk [vmem:[%s677 + $0x50] sm:$0xff] %vm844, %v817
      %856 = vst.msk [vmem:[%s677 + $0x58] sm:$0xff] %vm844, %v819
      %857 = vst.msk [vmem:[%s677 + $0x60] sm:$0xff] %vm844, %v821
      %858 = vst.msk [vmem:[%s677 + $0x68] sm:$0xff] %vm844, %v823
      %859 = vst.msk [vmem:[%s677 + $0x70] sm:$0xff] %vm844, %v825
      %860 = vst.msk [vmem:[%s677 + $0x78] sm:$0xff] %vm844, %v827
      %v862 = vshrl.u32 %v657, 16
      %v864 = vrot.slane %v862, 7
      %v865 = vshll.u32 %v657, 16
      %v867 = vor.u32 %v864, %v865
      %v869 = vshrl.u32 %v658, 16
      %v871 = vrot.slane %v869, 7
      %v872 = vshll.u32 %v658, 16
      %v874 = vor.u32 %v871, %v872
      %v876 = vshrl.u32 %v659, 16
      %v878 = vrot.slane %v876, 7
      %v879 = vshll.u32 %v659, 16
      %v881 = vor.u32 %v878, %v879
      %v883 = vshrl.u32 %v660, 16
      %v885 = vrot.slane %v883, 7
      %v886 = vshll.u32 %v660, 16
      %v888 = vor.u32 %v885, %v886
      %v890 = vshrl.u32 %v661, 16
      %v892 = vrot.slane %v890, 7
      %v893 = vshll.u32 %v661, 16
      %v895 = vor.u32 %v892, %v893
      %v897 = vshrl.u32 %v662, 16
      %v899 = vrot.slane %v897, 7
      %v900 = vshll.u32 %v662, 16
      %v902 = vor.u32 %v899, %v900
      %v904 = vshrl.u32 %v663, 16
      %v906 = vrot.slane %v904, 7
      %v907 = vshll.u32 %v663, 16
      %v909 = vor.u32 %v906, %v907
      %v911 = vshrl.u32 %v664, 16
      %v913 = vrot.slane %v911, 7
      %v914 = vshll.u32 %v664, 16
      %v916 = vor.u32 %v913, %v914
      %v918 = vshrl.u32 %v665, 16
      %v920 = vrot.slane %v918, 7
      %v921 = vshll.u32 %v665, 16
      %v923 = vor.u32 %v920, %v921
      %v925 = vshrl.u32 %v666, 16
      %v927 = vrot.slane %v925, 7
      %v928 = vshll.u32 %v666, 16
      %v930 = vor.u32 %v927, %v928
      %v932 = vshrl.u32 %v667, 16
      %v934 = vrot.slane %v932, 7
      %v935 = vshll.u32 %v667, 16
      %v937 = vor.u32 %v934, %v935
      %v939 = vshrl.u32 %v668, 16
      %v941 = vrot.slane %v939, 7
      %v942 = vshll.u32 %v668, 16
      %v944 = vor.u32 %v941, %v942
      %v946 = vshrl.u32 %v669, 16
      %v948 = vrot.slane %v946, 7
      %v949 = vshll.u32 %v669, 16
      %v951 = vor.u32 %v948, %v949
      %v953 = vshrl.u32 %v670, 16
      %v955 = vrot.slane %v953, 7
      %v956 = vshll.u32 %v670, 16
      %v958 = vor.u32 %v955, %v956
      %v960 = vshrl.u32 %v671, 16
      %v962 = vrot.slane %v960, 7
      %v963 = vshll.u32 %v671, 16
      %v965 = vor.u32 %v962, %v963
      %v967 = vshrl.u32 %v672, 16
      %v969 = vrot.slane %v967, 7
      %v970 = vshll.u32 %v672, 16
      %v972 = vor.u32 %v969, %v970
      %vm989 = vcmask 261120
      %vm990 = vsmask.f32 7938
      %vm991 = vmand %vm989, %vm990
      %v992 = vld [vmem:[%s677] sm:$0xff]
      %v993 = vsel %vm991, %v867, %v992
      %994 = vst [vmem:[%s677] sm:$0xff] %v993
      %v995 = vld [vmem:[%s677 + $0x8] sm:$0xff]
      %v996 = vsel %vm991, %v874, %v995
      %997 = vst [vmem:[%s677 + $0x8] sm:$0xff] %v996
      %v998 = vld [vmem:[%s677 + $0x10] sm:$0xff]
      %v999 = vsel %vm991, %v881, %v998
      %1000 = vst [vmem:[%s677 + $0x10] sm:$0xff] %v999
      %v1001 = vld [vmem:[%s677 + $0x18] sm:$0xff]
      %v1002 = vsel %vm991, %v888, %v1001
      %1003 = vst [vmem:[%s677 + $0x18] sm:$0xff] %v1002
      %v1004 = vld [vmem:[%s677 + $0x20] sm:$0xff]
      %v1005 = vsel %vm991, %v895, %v1004
      %1006 = vst [vmem:[%s677 + $0x20] sm:$0xff] %v1005
      %v1007 = vld [vmem:[%s677 + $0x28] sm:$0xff]
      %v1008 = vsel %vm991, %v902, %v1007
      %1009 = vst [vmem:[%s677 + $0x28] sm:$0xff] %v1008
      %v1010 = vld [vmem:[%s677 + $0x30] sm:$0xff]
      %v1011 = vsel %vm991, %v909, %v1010
      %1012 = vst [vmem:[%s677 + $0x30] sm:$0xff] %v1011
      %v1013 = vld [vmem:[%s677 + $0x38] sm:$0xff]
      %v1014 = vsel %vm991, %v916, %v1013
      %1015 = vst [vmem:[%s677 + $0x38] sm:$0xff] %v1014
      %v1016 = vld [vmem:[%s677 + $0x40] sm:$0xff]
      %v1017 = vsel %vm991, %v923, %v1016
      %1018 = vst [vmem:[%s677 + $0x40] sm:$0xff] %v1017
      %v1019 = vld [vmem:[%s677 + $0x48] sm:$0xff]
      %v1020 = vsel %vm991, %v930, %v1019
      %1021 = vst [vmem:[%s677 + $0x48] sm:$0xff] %v1020
      %v1022 = vld [vmem:[%s677 + $0x50] sm:$0xff]
      %v1023 = vsel %vm991, %v937, %v1022
      %1024 = vst [vmem:[%s677 + $0x50] sm:$0xff] %v1023
      %v1025 = vld [vmem:[%s677 + $0x58] sm:$0xff]
      %v1026 = vsel %vm991, %v944, %v1025
      %1027 = vst [vmem:[%s677 + $0x58] sm:$0xff] %v1026
      %v1028 = vld [vmem:[%s677 + $0x60] sm:$0xff]
      %v1029 = vsel %vm991, %v951, %v1028
      %1030 = vst [vmem:[%s677 + $0x60] sm:$0xff] %v1029
      %v1031 = vld [vmem:[%s677 + $0x68] sm:$0xff]
      %v1032 = vsel %vm991, %v958, %v1031
      %1033 = vst [vmem:[%s677 + $0x68] sm:$0xff] %v1032
      %v1034 = vld [vmem:[%s677 + $0x70] sm:$0xff]
      %v1035 = vsel %vm991, %v965, %v1034
      %1036 = vst [vmem:[%s677 + $0x70] sm:$0xff] %v1035
      %v1037 = vld [vmem:[%s677 + $0x78] sm:$0xff]
      %v1038 = vsel %vm991, %v972, %v1037
      %1039 = vst [vmem:[%s677 + $0x78] sm:$0xff] %v1038
      %v1040 = vrot.slane %v865, 1
      %v1041 = vor.u32 %v862, %v1040
      %v1042 = vrot.slane %v872, 1
      %v1043 = vor.u32 %v869, %v1042
      %v1044 = vrot.slane %v879, 1
      %v1045 = vor.u32 %v876, %v1044
      %v1046 = vrot.slane %v886, 1
      %v1047 = vor.u32 %v883, %v1046
      %v1048 = vrot.slane %v893, 1
      %v1049 = vor.u32 %v890, %v1048
      %v1050 = vrot.slane %v900, 1
      %v1051 = vor.u32 %v897, %v1050
      %v1052 = vrot.slane %v907, 1
      %v1053 = vor.u32 %v904, %v1052
      %v1054 = vrot.slane %v914, 1
      %v1055 = vor.u32 %v911, %v1054
      %v1056 = vrot.slane %v921, 1
      %v1057 = vor.u32 %v918, %v1056
      %v1058 = vrot.slane %v928, 1
      %v1059 = vor.u32 %v925, %v1058
      %v1060 = vrot.slane %v935, 1
      %v1061 = vor.u32 %v932, %v1060
      %v1062 = vrot.slane %v942, 1
      %v1063 = vor.u32 %v939, %v1062
      %v1064 = vrot.slane %v949, 1
      %v1065 = vor.u32 %v946, %v1064
      %v1066 = vrot.slane %v956, 1
      %v1067 = vor.u32 %v953, %v1066
      %v1068 = vrot.slane %v963, 1
      %v1069 = vor.u32 %v960, %v1068
      %v1070 = vrot.slane %v970, 1
      %v1071 = vor.u32 %v967, %v1070
      %1072 = vrot.lane.b32.xlu0 %v1041, 64
      %v1073 = vpop.permute.xlu0 %1072
      %1074 = vrot.lane.b32.xlu0 %v1043, 64
      %v1075 = vpop.permute.xlu0 %1074
      %1076 = vrot.lane.b32.xlu0 %v1045, 64
      %v1077 = vpop.permute.xlu0 %1076
      %1078 = vrot.lane.b32.xlu0 %v1047, 64
      %v1079 = vpop.permute.xlu0 %1078
      %1080 = vrot.lane.b32.xlu0 %v1049, 64
      %v1081 = vpop.permute.xlu0 %1080
      %1082 = vrot.lane.b32.xlu0 %v1051, 64
      %v1083 = vpop.permute.xlu0 %1082
      %1084 = vrot.lane.b32.xlu0 %v1053, 64
      %v1085 = vpop.permute.xlu0 %1084
      %1086 = vrot.lane.b32.xlu0 %v1055, 64
      %v1087 = vpop.permute.xlu0 %1086
      %1088 = vrot.lane.b32.xlu0 %v1057, 64
      %v1089 = vpop.permute.xlu0 %1088
      %1090 = vrot.lane.b32.xlu0 %v1059, 64
      %v1091 = vpop.permute.xlu0 %1090
      %1092 = vrot.lane.b32.xlu0 %v1061, 64
      %v1093 = vpop.permute.xlu0 %1092
      %1094 = vrot.lane.b32.xlu0 %v1063, 64
      %v1095 = vpop.permute.xlu0 %1094
      %1096 = vrot.lane.b32.xlu0 %v1065, 64
      %v1097 = vpop.permute.xlu0 %1096
      %1098 = vrot.lane.b32.xlu0 %v1067, 64
      %v1099 = vpop.permute.xlu0 %1098
      %1100 = vrot.lane.b32.xlu0 %v1069, 64
      %v1101 = vpop.permute.xlu0 %1100
      %1102 = vrot.lane.b32.xlu0 %v1071, 64
      %v1103 = vpop.permute.xlu0 %1102
      %vm1120 = vcmask 785920
      %vm1121 = vsmask.f32 7424
      %vm1122 = vmand %vm1120, %vm1121
      %v1123 = vld [vmem:[%s677] sm:$0xff]
      %v1124 = vsel %vm1122, %v1073, %v1123
      %1125 = vst [vmem:[%s677] sm:$0xff] %v1124
      %v1126 = vld [vmem:[%s677 + $0x8] sm:$0xff]
      %v1127 = vsel %vm1122, %v1075, %v1126
      %1128 = vst [vmem:[%s677 + $0x8] sm:$0xff] %v1127
      %v1129 = vld [vmem:[%s677 + $0x10] sm:$0xff]
      %v1130 = vsel %vm1122, %v1077, %v1129
      %1131 = vst [vmem:[%s677 + $0x10] sm:$0xff] %v1130
      %v1132 = vld [vmem:[%s677 + $0x18] sm:$0xff]
      %v1133 = vsel %vm1122, %v1079, %v1132
      %1134 = vst [vmem:[%s677 + $0x18] sm:$0xff] %v1133
      %v1135 = vld [vmem:[%s677 + $0x20] sm:$0xff]
      %v1136 = vsel %vm1122, %v1081, %v1135
      %1137 = vst [vmem:[%s677 + $0x20] sm:$0xff] %v1136
      %v1138 = vld [vmem:[%s677 + $0x28] sm:$0xff]
      %v1139 = vsel %vm1122, %v1083, %v1138
      %1140 = vst [vmem:[%s677 + $0x28] sm:$0xff] %v1139
      %v1141 = vld [vmem:[%s677 + $0x30] sm:$0xff]
      %v1142 = vsel %vm1122, %v1085, %v1141
      %1143 = vst [vmem:[%s677 + $0x30] sm:$0xff] %v1142
      %v1144 = vld [vmem:[%s677 + $0x38] sm:$0xff]
      %v1145 = vsel %vm1122, %v1087, %v1144
      %1146 = vst [vmem:[%s677 + $0x38] sm:$0xff] %v1145
      %v1147 = vld [vmem:[%s677 + $0x40] sm:$0xff]
      %v1148 = vsel %vm1122, %v1089, %v1147
      %1149 = vst [vmem:[%s677 + $0x40] sm:$0xff] %v1148
      %v1150 = vld [vmem:[%s677 + $0x48] sm:$0xff]
      %v1151 = vsel %vm1122, %v1091, %v1150
      %1152 = vst [vmem:[%s677 + $0x48] sm:$0xff] %v1151
      %v1153 = vld [vmem:[%s677 + $0x50] sm:$0xff]
      %v1154 = vsel %vm1122, %v1093, %v1153
      %1155 = vst [vmem:[%s677 + $0x50] sm:$0xff] %v1154
      %v1156 = vld [vmem:[%s677 + $0x58] sm:$0xff]
      %v1157 = vsel %vm1122, %v1095, %v1156
      %1158 = vst [vmem:[%s677 + $0x58] sm:$0xff] %v1157
      %v1159 = vld [vmem:[%s677 + $0x60] sm:$0xff]
      %v1160 = vsel %vm1122, %v1097, %v1159
      %1161 = vst [vmem:[%s677 + $0x60] sm:$0xff] %v1160
      %v1162 = vld [vmem:[%s677 + $0x68] sm:$0xff]
      %v1163 = vsel %vm1122, %v1099, %v1162
      %1164 = vst [vmem:[%s677 + $0x68] sm:$0xff] %v1163
      %v1165 = vld [vmem:[%s677 + $0x70] sm:$0xff]
      %v1166 = vsel %vm1122, %v1101, %v1165
      %1167 = vst [vmem:[%s677 + $0x70] sm:$0xff] %v1166
      %v1168 = vld [vmem:[%s677 + $0x78] sm:$0xff]
      %v1169 = vsel %vm1122, %v1103, %v1168
      %1170 = vst [vmem:[%s677 + $0x78] sm:$0xff] %v1169
      %v1171 = vld [vmem:[#allocation2] sm:$0xff]
      %v1172 = vld [vmem:[#allocation2 + $0x8] sm:$0xff]
      %v1173 = vld [vmem:[#allocation2 + $0x10] sm:$0xff]
      %v1174 = vld [vmem:[#allocation2 + $0x18] sm:$0xff]
      %v1175 = vld [vmem:[#allocation2 + $0x20] sm:$0xff]
      %v1176 = vld [vmem:[#allocation2 + $0x28] sm:$0xff]
      %v1177 = vld [vmem:[#allocation2 + $0x30] sm:$0xff]
      %v1178 = vld [vmem:[#allocation2 + $0x38] sm:$0xff]
      %v1179 = vld [vmem:[#allocation2 + $0x40] sm:$0xff]
      %v1180 = vld [vmem:[#allocation2 + $0x48] sm:$0xff]
      %v1181 = vld [vmem:[#allocation2 + $0x50] sm:$0xff]
      %v1182 = vld [vmem:[#allocation2 + $0x58] sm:$0xff]
      %v1183 = vld [vmem:[#allocation2 + $0x60] sm:$0xff]
      %v1184 = vld [vmem:[#allocation2 + $0x68] sm:$0xff]
      %v1185 = vld [vmem:[#allocation2 + $0x70] sm:$0xff]
      %v1186 = vld [vmem:[#allocation2 + $0x78] sm:$0xff]
      %v1187 = vld [vmem:[%s3] sm:$0xf]
      %v1188 = vld [vmem:[%s3 + $0x4] sm:$0xf]
      %v1189 = vld [vmem:[%s3 + $0x8] sm:$0xf]
      %v1190 = vld [vmem:[%s3 + $0xc] sm:$0xf]
      %v1191 = vld [vmem:[%s3 + $0x10] sm:$0xf]
      %v1192 = vld [vmem:[%s3 + $0x14] sm:$0xf]
      %v1193 = vld [vmem:[%s3 + $0x18] sm:$0xf]
      %v1194 = vld [vmem:[%s3 + $0x1c] sm:$0xf]
      %v1195 = vld [vmem:[%s3 + $0x20] sm:$0xf]
      %v1196 = vld [vmem:[%s3 + $0x24] sm:$0xf]
      %v1197 = vld [vmem:[%s3 + $0x28] sm:$0xf]
      %v1198 = vld [vmem:[%s3 + $0x2c] sm:$0xf]
      %v1199 = vld [vmem:[%s677] sm:$0xff]
      %v1200 = vld [vmem:[%s677 + $0x8] sm:$0xff]
      %v1201 = vld [vmem:[%s677 + $0x10] sm:$0xff]
      %v1202 = vld [vmem:[%s677 + $0x18] sm:$0xff]
      %v1203 = vld [vmem:[%s677 + $0x20] sm:$0xff]
      %v1204 = vld [vmem:[%s677 + $0x28] sm:$0xff]
      %v1205 = vld [vmem:[%s677 + $0x30] sm:$0xff]
      %v1206 = vld [vmem:[%s677 + $0x38] sm:$0xff]
      %v1207 = vld [vmem:[%s677 + $0x40] sm:$0xff]
      %v1208 = vld [vmem:[%s677 + $0x48] sm:$0xff]
      %v1209 = vld [vmem:[%s677 + $0x50] sm:$0xff]
      %v1210 = vld [vmem:[%s677 + $0x58] sm:$0xff]
      %v1211 = vld [vmem:[%s677 + $0x60] sm:$0xff]
      %v1212 = vld [vmem:[%s677 + $0x68] sm:$0xff]
      %v1213 = vld [vmem:[%s677 + $0x70] sm:$0xff]
      %v1214 = vld [vmem:[%s677 + $0x78] sm:$0xff]
      %s1215 = scalar_lea.vmem %s3, 48
      %v1216 = vld [vmem:[%s1215] sm:$0xf]
      %v1217 = vld [vmem:[%s1215 + $0x4] sm:$0xf]
      %v1218 = vld [vmem:[%s1215 + $0x8] sm:$0xf]
      %v1219 = vld [vmem:[%s1215 + $0xc] sm:$0xf]
      %v1220 = vld [vmem:[%s1215 + $0x10] sm:$0xf]
      %v1221 = vld [vmem:[%s1215 + $0x14] sm:$0xf]
      %v1222 = vld [vmem:[%s1215 + $0x18] sm:$0xf]
      %v1223 = vld [vmem:[%s1215 + $0x1c] sm:$0xf]
      %v1224 = vld [vmem:[%s1215 + $0x20] sm:$0xf]
      %v1225 = vld [vmem:[%s1215 + $0x24] sm:$0xf]
      %v1226 = vld [vmem:[%s1215 + $0x28] sm:$0xf]
      %v1227 = vld [vmem:[%s1215 + $0x2c] sm:$0xf]
      %v1240 = vunpack.c.l.b16 %v1216
      %v1241 = vunpack.c.l.b16 %v1217
      %v1242 = vunpack.c.l.b16 %v1218
      %v1243 = vunpack.c.l.b16 %v1219
      %v1244 = vunpack.c.l.b16 %v1220
      %v1245 = vunpack.c.l.b16 %v1221
      %v1246 = vunpack.c.l.b16 %v1222
      %v1247 = vunpack.c.l.b16 %v1223
      %v1248 = vunpack.c.l.b16 %v1224
      %v1249 = vunpack.c.l.b16 %v1225
      %v1250 = vunpack.c.l.b16 %v1226
      %v1251 = vunpack.c.l.b16 %v1227
      %v1252 = vpack.c.b16 %v1241, %v1240
      %v1253 = vpack.c.b16 %v1243, %v1242
      %v1254 = vpack.c.b16 %v1245, %v1244
      %v1255 = vpack.c.b16 %v1247, %v1246
      %v1256 = vpack.c.b16 %v1249, %v1248
      %v1257 = vpack.c.b16 %v1251, %v1250
      %v1265 = vsel %vm673, %v1199, 0
      %v1268 = vsel %vm673, %v1200, 0
      %v1271 = vsel %vm673, %v1201, 0
      %v1274 = vsel %vm673, %v1202, 0
      %v1277 = vsel %vm673, %v1203, 0
      %v1280 = vsel %vm673, %v1204, 0
      %v1283 = vsel %vm673, %v1205, 0
      %v1286 = vsel %vm673, %v1206, 0
      %v1289 = vsel %vm673, %v1207, 0
      %v1292 = vsel %vm673, %v1208, 0
      %v1295 = vsel %vm673, %v1209, 0
      %v1298 = vsel %vm673, %v1210, 0
      %v1301 = vsel %vm673, %v1211, 0
      %v1304 = vsel %vm673, %v1212, 0
      %v1307 = vsel %vm673, %v1213, 0
      %v1310 = vsel %vm673, %v1214, 0
      %1312 = vmatprep.subr.bf16.mxu0 0
      %1313 = vmatpush1.bf16.msra.mxu0 %v1252
      %1314 = vmatprep.subr.bf16.mxu0 0
      %1315 = vmatpush1.bf16.msra.mxu0 %v1253
      %1316 = vmatprep.subr.bf16.mxu0 0
      %1317 = vmatpush1.bf16.msra.mxu0 %v1254
      %1318 = vmatprep.subr.bf16.mxu0 0
      %1319 = vmatpush1.bf16.msra.mxu0 %v1255
      %1320 = vmatprep.subr.bf16.mxu0 0
      %1321 = vmatpush1.bf16.msra.mxu0 %v1256
      %1322 = vmatprep.subr.bf16.mxu0 0
      %1323 = vmatpush1.bf16.msra.mxu0 %v1257
      %1324 = vmatprep.subr.bf16.mxu0 0
      %1325 = vmatpush1.bf16.msra.mxu0 0
      %1326 = vmatprep.subr.bf16.mxu0 0
      %1327 = vmatpush1.bf16.msra.mxu0 0
      %1328 = vmatprep.subr.bf16.mxu0 0
      %1329 = vmatpush1.bf16.msra.mxu0 0
      %1330 = vmatprep.subr.bf16.mxu0 0
      %1331 = vmatpush1.bf16.msra.mxu0 0
      %1332 = vmatprep.subr.bf16.mxu0 0
      %1333 = vmatpush1.bf16.msra.mxu0 0
      %1334 = vmatprep.subr.bf16.mxu0 0
      %1335 = vmatpush1.bf16.msra.mxu0 0
      %1336 = vmatprep.subr.bf16.mxu0 0
      %1337 = vmatpush1.bf16.msra.mxu0 0
      %1338 = vmatprep.subr.bf16.mxu0 0
      %1339 = vmatpush1.bf16.msra.mxu0 0
      %1340 = vmatprep.subr.bf16.mxu0 0
      %1341 = vmatpush1.bf16.msra.mxu0 0
      %1342 = vmatprep.subr.bf16.mxu0 0
      %1343 = vmatpush1.bf16.msra.mxu0 0
      %1344 = vmatprep.mubr.bf16.mxu0 0
      %1345 = vmatmul.mubr.bf16.gmra.mrb[0].mxu0 %v1265
      %v1346 = vpop.f32.mrb[0].mxu0
      %v1347 = vadd.f32 0.0, %v1346
      %v1348 = vpop.f32.mrb[0].mxu0
      %v1349 = vpop.f32.mrb[0].mxu0
      %v1350 = vadd.f32 0.0, %v1349
      %v1351 = vpop.f32.mrb[0].mxu0
      %1352 = vmatprep.mubr.bf16.mxu0 0
      %1353 = vmatmul.mubr.bf16.gmra.mrb[0].mxu0 %v1268
      %v1354 = vpop.f32.mrb[0].mxu0
      %v1355 = vadd.f32 0.0, %v1354
      %v1356 = vpop.f32.mrb[0].mxu0
      %v1357 = vpop.f32.mrb[0].mxu0
      %v1358 = vadd.f32 0.0, %v1357
      %v1359 = vpop.f32.mrb[0].mxu0
      %1360 = vmatprep.mubr.bf16.mxu0 0
      %1361 = vmatmul.mubr.bf16.gmra.mrb[0].mxu0 %v1271
      %v1362 = vpop.f32.mrb[0].mxu0
      %v1363 = vadd.f32 0.0, %v1362
      %v1364 = vpop.f32.mrb[0].mxu0
      %v1365 = vpop.f32.mrb[0].mxu0
      %v1366 = vadd.f32 0.0, %v1365
      %v1367 = vpop.f32.mrb[0].mxu0
      %1368 = vmatprep.mubr.bf16.mxu0 0
      %1369 = vmatmul.mubr.bf16.gmra.mrb[0].mxu0 %v1274
      %v1370 = vpop.f32.mrb[0].mxu0
      %v1371 = vadd.f32 0.0, %v1370
      %v1372 = vpop.f32.mrb[0].mxu0
      %v1373 = vpop.f32.mrb[0].mxu0
      %v1374 = vadd.f32 0.0, %v1373
      %v1375 = vpop.f32.mrb[0].mxu0
      %1376 = vmatprep.mubr.bf16.mxu0 0
      %1377 = vmatmul.mubr.bf16.gmra.mrb[0].mxu0 %v1277
      %v1378 = vpop.f32.mrb[0].mxu0
      %v1379 = vadd.f32 0.0, %v1378
      %v1380 = vpop.f32.mrb[0].mxu0
      %v1381 = vpop.f32.mrb[0].mxu0
      %v1382 = vadd.f32 0.0, %v1381
      %v1383 = vpop.f32.mrb[0].mxu0
      %1384 = vmatprep.mubr.bf16.mxu0 0
      %1385 = vmatmul.mubr.bf16.gmra.mrb[0].mxu0 %v1280
      %v1386 = vpop.f32.mrb[0].mxu0
      %v1387 = vadd.f32 0.0, %v1386
      %v1388 = vpop.f32.mrb[0].mxu0
      %v1389 = vpop.f32.mrb[0].mxu0
      %v1390 = vadd.f32 0.0, %v1389
      %v1391 = vpop.f32.mrb[0].mxu0
      %1392 = vmatprep.mubr.bf16.mxu0 0
      %1393 = vmatmul.mubr.bf16.gmra.mrb[0].mxu0 %v1283
      %v1394 = vpop.f32.mrb[0].mxu0
      %v1395 = vadd.f32 0.0, %v1394
      %v1396 = vpop.f32.mrb[0].mxu0
      %v1397 = vpop.f32.mrb[0].mxu0
      %v1398 = vadd.f32 0.0, %v1397
      %v1399 = vpop.f32.mrb[0].mxu0
      %1400 = vmatprep.mubr.bf16.mxu0 0
      %1401 = vmatmul.mubr.bf16.gmra.mrb[0].mxu0 %v1286
      %v1402 = vpop.f32.mrb[0].mxu0
      %v1403 = vadd.f32 0.0, %v1402
      %v1404 = vpop.f32.mrb[0].mxu0
      %v1405 = vpop.f32.mrb[0].mxu0
      %v1406 = vadd.f32 0.0, %v1405
      %v1407 = vpop.f32.mrb[0].mxu0
      %1408 = vmatprep.mubr.bf16.mxu0 0
      %1409 = vmatmul.mubr.bf16.gmra.mrb[0].mxu0 %v1289
      %v1410 = vpop.f32.mrb[0].mxu0
      %v1411 = vadd.f32 0.0, %v1410
      %v1412 = vpop.f32.mrb[0].mxu0
      %v1413 = vpop.f32.mrb[0].mxu0
      %v1414 = vadd.f32 0.0, %v1413
      %v1415 = vpop.f32.mrb[0].mxu0
      %1416 = vmatprep.mubr.bf16.mxu0 0
      %1417 = vmatmul.mubr.bf16.gmra.mrb[0].mxu0 %v1292
      %v1418 = vpop.f32.mrb[0].mxu0
      %v1419 = vadd.f32 0.0, %v1418
      %v1420 = vpop.f32.mrb[0].mxu0
      %v1421 = vpop.f32.mrb[0].mxu0
      %v1422 = vadd.f32 0.0, %v1421
      %v1423 = vpop.f32.mrb[0].mxu0
      %1424 = vmatprep.mubr.bf16.mxu0 0
      %1425 = vmatmul.mubr.bf16.gmra.mrb[0].mxu0 %v1295
      %v1426 = vpop.f32.mrb[0].mxu0
      %v1427 = vadd.f32 0.0, %v1426
      %v1428 = vpop.f32.mrb[0].mxu0
      %v1429 = vpop.f32.mrb[0].mxu0
      %v1430 = vadd.f32 0.0, %v1429
      %v1431 = vpop.f32.mrb[0].mxu0
      %1432 = vmatprep.mubr.bf16.mxu0 0
      %1433 = vmatmul.mubr.bf16.gmra.mrb[0].mxu0 %v1298
      %v1434 = vpop.f32.mrb[0].mxu0
      %v1435 = vadd.f32 0.0, %v1434
      %v1436 = vpop.f32.mrb[0].mxu0
      %v1437 = vpop.f32.mrb[0].mxu0
      %v1438 = vadd.f32 0.0, %v1437
      %v1439 = vpop.f32.mrb[0].mxu0
      %1440 = vmatprep.mubr.bf16.mxu0 0
      %1441 = vmatmul.mubr.bf16.gmra.mrb[0].mxu0 %v1301
      %v1442 = vpop.f32.mrb[0].mxu0
      %v1443 = vadd.f32 0.0, %v1442
      %v1444 = vpop.f32.mrb[0].mxu0
      %v1445 = vpop.f32.mrb[0].mxu0
      %v1446 = vadd.f32 0.0, %v1445
      %v1447 = vpop.f32.mrb[0].mxu0
      %1448 = vmatprep.mubr.bf16.mxu0 0
      %1449 = vmatmul.mubr.bf16.gmra.mrb[0].mxu0 %v1304
      %v1450 = vpop.f32.mrb[0].mxu0
      %v1451 = vadd.f32 0.0, %v1450
      %v1452 = vpop.f32.mrb[0].mxu0
      %v1453 = vpop.f32.mrb[0].mxu0
      %v1454 = vadd.f32 0.0, %v1453
      %v1455 = vpop.f32.mrb[0].mxu0
      %1456 = vmatprep.mubr.bf16.mxu0 0
      %1457 = vmatmul.mubr.bf16.gmra.mrb[0].mxu0 %v1307
      %v1458 = vpop.f32.mrb[0].mxu0
      %v1459 = vadd.f32 0.0, %v1458
      %v1460 = vpop.f32.mrb[0].mxu0
      %v1461 = vpop.f32.mrb[0].mxu0
      %v1462 = vadd.f32 0.0, %v1461
      %v1463 = vpop.f32.mrb[0].mxu0
      %1464 = vmatprep.mubr.bf16.mxu0 0
      %1465 = vmatmul.mubr.bf16.gmra.mrb[0].mxu0 %v1310
      %v1466 = vpop.f32.mrb[0].mxu0
      %v1467 = vadd.f32 0.0, %v1466
      %v1468 = vpop.f32.mrb[0].mxu0
      %v1469 = vpop.f32.mrb[0].mxu0
      %v1470 = vadd.f32 0.0, %v1469
      %v1471 = vpop.f32.mrb[0].mxu0
      %1472 = vdwg.mxu0
      %v1485 = vunpack.c.l.b16 %v1187
      %v1486 = vunpack.c.l.b16 %v1188
      %v1487 = vunpack.c.l.b16 %v1189
      %v1488 = vunpack.c.l.b16 %v1190
      %v1489 = vunpack.c.l.b16 %v1191
      %v1490 = vunpack.c.l.b16 %v1192
      %v1491 = vunpack.c.l.b16 %v1193
      %v1492 = vunpack.c.l.b16 %v1194
      %v1493 = vunpack.c.l.b16 %v1195
      %v1494 = vunpack.c.l.b16 %v1196
      %v1495 = vunpack.c.l.b16 %v1197
      %v1496 = vunpack.c.l.b16 %v1198
      %v1497 = vpack.c.b16 %v1486, %v1485
      %v1498 = vpack.c.b16 %v1488, %v1487
      %v1499 = vpack.c.b16 %v1490, %v1489
      %v1500 = vpack.c.b16 %v1492, %v1491
      %v1501 = vpack.c.b16 %v1494, %v1493
      %v1502 = vpack.c.b16 %v1496, %v1495
      %v1510 = vsel %vm673, %v1171, 0
      %v1513 = vsel %vm673, %v1172, 0
      %v1516 = vsel %vm673, %v1173, 0
      %v1519 = vsel %vm673, %v1174, 0
      %v1522 = vsel %vm673, %v1175, 0
      %v1525 = vsel %vm673, %v1176, 0
      %v1528 = vsel %vm673, %v1177, 0
      %v1531 = vsel %vm673, %v1178, 0
      %v1534 = vsel %vm673, %v1179, 0
      %v1537 = vsel %vm673, %v1180, 0
      %v1540 = vsel %vm673, %v1181, 0
      %v1543 = vsel %vm673, %v1182, 0
      %v1546 = vsel %vm673, %v1183, 0
      %v1549 = vsel %vm673, %v1184, 0
      %v1552 = vsel %vm673, %v1185, 0
      %v1555 = vsel %vm673, %v1186, 0
      %1557 = vmatprep.subr.bf16.mxu0 0
      %1558 = vmatpush1.bf16.msra.mxu0 %v1497
      %1559 = vmatprep.subr.bf16.mxu0 0
      %1560 = vmatpush1.bf16.msra.mxu0 %v1498
      %1561 = vmatprep.subr.bf16.mxu0 0
      %1562 = vmatpush1.bf16.msra.mxu0 %v1499
      %1563 = vmatprep.subr.bf16.mxu0 0
      %1564 = vmatpush1.bf16.msra.mxu0 %v1500
      %1565 = vmatprep.subr.bf16.mxu0 0
      %1566 = vmatpush1.bf16.msra.mxu0 %v1501
      %1567 = vmatprep.subr.bf16.mxu0 0
      %1568 = vmatpush1.bf16.msra.mxu0 %v1502
      %1569 = vmatprep.subr.bf16.mxu0 0
      %1570 = vmatpush1.bf16.msra.mxu0 0
      %1571 = vmatprep.subr.bf16.mxu0 0
      %1572 = vmatpush1.bf16.msra.mxu0 0
      %1573 = vmatprep.subr.bf16.mxu0 0
      %1574 = vmatpush1.bf16.msra.mxu0 0
      %1575 = vmatprep.subr.bf16.mxu0 0
      %1576 = vmatpush1.bf16.msra.mxu0 0
      %1577 = vmatprep.subr.bf16.mxu0 0
      %1578 = vmatpush1.bf16.msra.mxu0 0
      %1579 = vmatprep.subr.bf16.mxu0 0
      %1580 = vmatpush1.bf16.msra.mxu0 0
      %1581 = vmatprep.subr.bf16.mxu0 0
      %1582 = vmatpush1.bf16.msra.mxu0 0
      %1583 = vmatprep.subr.bf16.mxu0 0
      %1584 = vmatpush1.bf16.msra.mxu0 0
      %1585 = vmatprep.subr.bf16.mxu0 0
      %1586 = vmatpush1.bf16.msra.mxu0 0
      %1587 = vmatprep.subr.bf16.mxu0 0
      %1588 = vmatpush1.bf16.msra.mxu0 0
      %1589 = vmatprep.mubr.bf16.mxu0 0
      %1590 = vmatmul.mubr.bf16.gmra.mrb[0].mxu0 %v1510
      %v1591 = vpop.f32.mrb[0].mxu0
      %v1592 = vadd.f32 %v1347, %v1591
      %v1593 = vpop.f32.mrb[0].mxu0
      %v1594 = vpop.f32.mrb[0].mxu0
      %v1595 = vadd.f32 %v1350, %v1594
      %v1596 = vpop.f32.mrb[0].mxu0
      %1597 = vmatprep.mubr.bf16.mxu0 0
      %1598 = vmatmul.mubr.bf16.gmra.mrb[0].mxu0 %v1513
      %v1599 = vpop.f32.mrb[0].mxu0
      %v1600 = vadd.f32 %v1355, %v1599
      %v1601 = vpop.f32.mrb[0].mxu0
      %v1602 = vpop.f32.mrb[0].mxu0
      %v1603 = vadd.f32 %v1358, %v1602
      %v1604 = vpop.f32.mrb[0].mxu0
      %1605 = vmatprep.mubr.bf16.mxu0 0
      %1606 = vmatmul.mubr.bf16.gmra.mrb[0].mxu0 %v1516
      %v1607 = vpop.f32.mrb[0].mxu0
      %v1608 = vadd.f32 %v1363, %v1607
      %v1609 = vpop.f32.mrb[0].mxu0
      %v1610 = vpop.f32.mrb[0].mxu0
      %v1611 = vadd.f32 %v1366, %v1610
      %v1612 = vpop.f32.mrb[0].mxu0
      %1613 = vmatprep.mubr.bf16.mxu0 0
      %1614 = vmatmul.mubr.bf16.gmra.mrb[0].mxu0 %v1519
      %v1615 = vpop.f32.mrb[0].mxu0
      %v1616 = vadd.f32 %v1371, %v1615
      %v1617 = vpop.f32.mrb[0].mxu0
      %v1618 = vpop.f32.mrb[0].mxu0
      %v1619 = vadd.f32 %v1374, %v1618
      %v1620 = vpop.f32.mrb[0].mxu0
      %1621 = vmatprep.mubr.bf16.mxu0 0
      %1622 = vmatmul.mubr.bf16.gmra.mrb[0].mxu0 %v1522
      %v1623 = vpop.f32.mrb[0].mxu0
      %v1624 = vadd.f32 %v1379, %v1623
      %v1625 = vpop.f32.mrb[0].mxu0
      %v1626 = vpop.f32.mrb[0].mxu0
      %v1627 = vadd.f32 %v1382, %v1626
      %v1628 = vpop.f32.mrb[0].mxu0
      %1629 = vmatprep.mubr.bf16.mxu0 0
      %1630 = vmatmul.mubr.bf16.gmra.mrb[0].mxu0 %v1525
      %v1631 = vpop.f32.mrb[0].mxu0
      %v1632 = vadd.f32 %v1387, %v1631
      %v1633 = vpop.f32.mrb[0].mxu0
      %v1634 = vpop.f32.mrb[0].mxu0
      %v1635 = vadd.f32 %v1390, %v1634
      %v1636 = vpop.f32.mrb[0].mxu0
      %1637 = vmatprep.mubr.bf16.mxu0 0
      %1638 = vmatmul.mubr.bf16.gmra.mrb[0].mxu0 %v1528
      %v1639 = vpop.f32.mrb[0].mxu0
      %v1640 = vadd.f32 %v1395, %v1639
      %v1641 = vpop.f32.mrb[0].mxu0
      %v1642 = vpop.f32.mrb[0].mxu0
      %v1643 = vadd.f32 %v1398, %v1642
      %v1644 = vpop.f32.mrb[0].mxu0
      %1645 = vmatprep.mubr.bf16.mxu0 0
      %1646 = vmatmul.mubr.bf16.gmra.mrb[0].mxu0 %v1531
      %v1647 = vpop.f32.mrb[0].mxu0
      %v1648 = vadd.f32 %v1403, %v1647
      %v1649 = vpop.f32.mrb[0].mxu0
      %v1650 = vpop.f32.mrb[0].mxu0
      %v1651 = vadd.f32 %v1406, %v1650
      %v1652 = vpop.f32.mrb[0].mxu0
      %1653 = vmatprep.mubr.bf16.mxu0 0
      %1654 = vmatmul.mubr.bf16.gmra.mrb[0].mxu0 %v1534
      %v1655 = vpop.f32.mrb[0].mxu0
      %v1656 = vadd.f32 %v1411, %v1655
      %v1657 = vpop.f32.mrb[0].mxu0
      %v1658 = vpop.f32.mrb[0].mxu0
      %v1659 = vadd.f32 %v1414, %v1658
      %v1660 = vpop.f32.mrb[0].mxu0
      %1661 = vmatprep.mubr.bf16.mxu0 0
      %1662 = vmatmul.mubr.bf16.gmra.mrb[0].mxu0 %v1537
      %v1663 = vpop.f32.mrb[0].mxu0
      %v1664 = vadd.f32 %v1419, %v1663
      %v1665 = vpop.f32.mrb[0].mxu0
      %v1666 = vpop.f32.mrb[0].mxu0
      %v1667 = vadd.f32 %v1422, %v1666
      %v1668 = vpop.f32.mrb[0].mxu0
      %1669 = vmatprep.mubr.bf16.mxu0 0
      %1670 = vmatmul.mubr.bf16.gmra.mrb[0].mxu0 %v1540
      %v1671 = vpop.f32.mrb[0].mxu0
      %v1672 = vadd.f32 %v1427, %v1671
      %v1673 = vpop.f32.mrb[0].mxu0
      %v1674 = vpop.f32.mrb[0].mxu0
      %v1675 = vadd.f32 %v1430, %v1674
      %v1676 = vpop.f32.mrb[0].mxu0
      %1677 = vmatprep.mubr.bf16.mxu0 0
      %1678 = vmatmul.mubr.bf16.gmra.mrb[0].mxu0 %v1543
      %v1679 = vpop.f32.mrb[0].mxu0
      %v1680 = vadd.f32 %v1435, %v1679
      %v1681 = vpop.f32.mrb[0].mxu0
      %v1682 = vpop.f32.mrb[0].mxu0
      %v1683 = vadd.f32 %v1438, %v1682
      %v1684 = vpop.f32.mrb[0].mxu0
      %1685 = vmatprep.mubr.bf16.mxu0 0
      %1686 = vmatmul.mubr.bf16.gmra.mrb[0].mxu0 %v1546
      %v1687 = vpop.f32.mrb[0].mxu0
      %v1688 = vadd.f32 %v1443, %v1687
      %v1689 = vpop.f32.mrb[0].mxu0
      %v1690 = vpop.f32.mrb[0].mxu0
      %v1691 = vadd.f32 %v1446, %v1690
      %v1692 = vpop.f32.mrb[0].mxu0
      %1693 = vmatprep.mubr.bf16.mxu0 0
      %1694 = vmatmul.mubr.bf16.gmra.mrb[0].mxu0 %v1549
      %v1695 = vpop.f32.mrb[0].mxu0
      %v1696 = vadd.f32 %v1451, %v1695
      %v1697 = vpop.f32.mrb[0].mxu0
      %v1698 = vpop.f32.mrb[0].mxu0
      %v1699 = vadd.f32 %v1454, %v1698
      %v1700 = vpop.f32.mrb[0].mxu0
      %1701 = vmatprep.mubr.bf16.mxu0 0
      %1702 = vmatmul.mubr.bf16.gmra.mrb[0].mxu0 %v1552
      %v1703 = vpop.f32.mrb[0].mxu0
      %v1704 = vadd.f32 %v1459, %v1703
      %v1705 = vpop.f32.mrb[0].mxu0
      %v1706 = vpop.f32.mrb[0].mxu0
      %v1707 = vadd.f32 %v1462, %v1706
      %v1708 = vpop.f32.mrb[0].mxu0
      %1709 = vmatprep.mubr.bf16.mxu0 0
      %1710 = vmatmul.mubr.bf16.gmra.mrb[0].mxu0 %v1555
      %v1711 = vpop.f32.mrb[0].mxu0
      %v1712 = vadd.f32 %v1467, %v1711
      %v1713 = vpop.f32.mrb[0].mxu0
      %v1714 = vpop.f32.mrb[0].mxu0
      %v1715 = vadd.f32 %v1470, %v1714
      %v1716 = vpop.f32.mrb[0].mxu0
      %1717 = vdwg.mxu0
      %s1718 = scalar_lea.vmem [#allocation2], 16
      %v1719 = vld [vmem:[%s1718] sm:$0xff]
      %v1720 = vld [vmem:[%s1718 + $0x8] sm:$0xff]
      %v1721 = vld [vmem:[%s1718 + $0x10] sm:$0xff]
      %v1722 = vld [vmem:[%s1718 + $0x18] sm:$0xff]
      %v1723 = vld [vmem:[%s1718 + $0x20] sm:$0xff]
      %v1724 = vld [vmem:[%s1718 + $0x28] sm:$0xff]
      %v1725 = vld [vmem:[%s1718 + $0x30] sm:$0xff]
      %v1726 = vld [vmem:[%s1718 + $0x38] sm:$0xff]
      %v1727 = vld [vmem:[%s1718 + $0x40] sm:$0xff]
      %v1728 = vld [vmem:[%s1718 + $0x48] sm:$0xff]
      %v1729 = vld [vmem:[%s1718 + $0x50] sm:$0xff]
      %v1730 = vld [vmem:[%s1718 + $0x58] sm:$0xff]
      %v1731 = vld [vmem:[%s1718 + $0x60] sm:$0xff]
      %v1732 = vld [vmem:[%s1718 + $0x68] sm:$0xff]
      %v1733 = vld [vmem:[%s1718 + $0x70] sm:$0xff]
      %v1734 = vld [vmem:[%s1718 + $0x78] sm:$0xff]
      %s1735 = scalar_lea.vmem %s3, 96
      %v1736 = vld [vmem:[%s1735] sm:$0xf]
      %v1737 = vld [vmem:[%s1735 + $0x4] sm:$0xf]
      %v1738 = vld [vmem:[%s1735 + $0x8] sm:$0xf]
      %v1739 = vld [vmem:[%s1735 + $0xc] sm:$0xf]
      %v1740 = vld [vmem:[%s1735 + $0x10] sm:$0xf]
      %v1741 = vld [vmem:[%s1735 + $0x14] sm:$0xf]
      %v1742 = vld [vmem:[%s1735 + $0x18] sm:$0xf]
      %v1743 = vld [vmem:[%s1735 + $0x1c] sm:$0xf]
      %v1744 = vld [vmem:[%s1735 + $0x20] sm:$0xf]
      %v1745 = vld [vmem:[%s1735 + $0x24] sm:$0xf]
      %v1746 = vld [vmem:[%s1735 + $0x28] sm:$0xf]
      %v1747 = vld [vmem:[%s1735 + $0x2c] sm:$0xf]
      %v1760 = vunpack.c.l.b16 %v1736
      %v1761 = vunpack.c.l.b16 %v1737
      %v1762 = vunpack.c.l.b16 %v1738
      %v1763 = vunpack.c.l.b16 %v1739
      %v1764 = vunpack.c.l.b16 %v1740
      %v1765 = vunpack.c.l.b16 %v1741
      %v1766 = vunpack.c.l.b16 %v1742
      %v1767 = vunpack.c.l.b16 %v1743
      %v1768 = vunpack.c.l.b16 %v1744
      %v1769 = vunpack.c.l.b16 %v1745
      %v1770 = vunpack.c.l.b16 %v1746
      %v1771 = vunpack.c.l.b16 %v1747
      %v1772 = vpack.c.b16 %v1761, %v1760
      %v1773 = vpack.c.b16 %v1763, %v1762
      %v1774 = vpack.c.b16 %v1765, %v1764
      %v1775 = vpack.c.b16 %v1767, %v1766
      %v1776 = vpack.c.b16 %v1769, %v1768
      %v1777 = vpack.c.b16 %v1771, %v1770
      %v1785 = vsel %vm673, %v1719, 0
      %v1788 = vsel %vm673, %v1720, 0
      %v1791 = vsel %vm673, %v1721, 0
      %v1794 = vsel %vm673, %v1722, 0
      %v1797 = vsel %vm673, %v1723, 0
      %v1800 = vsel %vm673, %v1724, 0
      %v1803 = vsel %vm673, %v1725, 0
      %v1806 = vsel %vm673, %v1726, 0
      %v1809 = vsel %vm673, %v1727, 0
      %v1812 = vsel %vm673, %v1728, 0
      %v1815 = vsel %vm673, %v1729, 0
      %v1818 = vsel %vm673, %v1730, 0
      %v1821 = vsel %vm673, %v1731, 0
      %v1824 = vsel %vm673, %v1732, 0
      %v1827 = vsel %vm673, %v1733, 0
      %v1830 = vsel %vm673, %v1734, 0
      %1832 = vmatprep.subr.bf16.mxu0 0
      %1833 = vmatpush1.bf16.msra.mxu0 %v1772
      %1834 = vmatprep.subr.bf16.mxu0 0
      %1835 = vmatpush1.bf16.msra.mxu0 %v1773
      %1836 = vmatprep.subr.bf16.mxu0 0
      %1837 = vmatpush1.bf16.msra.mxu0 %v1774
      %1838 = vmatprep.subr.bf16.mxu0 0
      %1839 = vmatpush1.bf16.msra.mxu0 %v1775
      %1840 = vmatprep.subr.bf16.mxu0 0
      %1841 = vmatpush1.bf16.msra.mxu0 %v1776
      %1842 = vmatprep.subr.bf16.mxu0 0
      %1843 = vmatpush1.bf16.msra.mxu0 %v1777
      %1844 = vmatprep.subr.bf16.mxu0 0
      %1845 = vmatpush1.bf16.msra.mxu0 0
      %1846 = vmatprep.subr.bf16.mxu0 0
      %1847 = vmatpush1.bf16.msra.mxu0 0
      %1848 = vmatprep.subr.bf16.mxu0 0
      %1849 = vmatpush1.bf16.msra.mxu0 0
      %1850 = vmatprep.subr.bf16.mxu0 0
      %1851 = vmatpush1.bf16.msra.mxu0 0
      %1852 = vmatprep.subr.bf16.mxu0 0
      %1853 = vmatpush1.bf16.msra.mxu0 0
      %1854 = vmatprep.subr.bf16.mxu0 0
      %1855 = vmatpush1.bf16.msra.mxu0 0
      %1856 = vmatprep.subr.bf16.mxu0 0
      %1857 = vmatpush1.bf16.msra.mxu0 0
      %1858 = vmatprep.subr.bf16.mxu0 0
      %1859 = vmatpush1.bf16.msra.mxu0 0
      %1860 = vmatprep.subr.bf16.mxu0 0
      %1861 = vmatpush1.bf16.msra.mxu0 0
      %1862 = vmatprep.subr.bf16.mxu0 0
      %1863 = vmatpush1.bf16.msra.mxu0 0
      %1864 = vmatprep.mubr.bf16.mxu0 0
      %1865 = vmatmul.mubr.bf16.gmra.mrb[0].mxu0 %v1785
      %v1866 = vpop.f32.mrb[0].mxu0
      %v1867 = vadd.f32 0.0, %v1866
      %v1868 = vpop.f32.mrb[0].mxu0
      %v1869 = vpop.f32.mrb[0].mxu0
      %v1870 = vadd.f32 0.0, %v1869
      %v1871 = vpop.f32.mrb[0].mxu0
      %1872 = vmatprep.mubr.bf16.mxu0 0
      %1873 = vmatmul.mubr.bf16.gmra.mrb[0].mxu0 %v1788
      %v1874 = vpop.f32.mrb[0].mxu0
      %v1875 = vadd.f32 0.0, %v1874
      %v1876 = vpop.f32.mrb[0].mxu0
      %v1877 = vpop.f32.mrb[0].mxu0
      %v1878 = vadd.f32 0.0, %v1877
      %v1879 = vpop.f32.mrb[0].mxu0
      %1880 = vmatprep.mubr.bf16.mxu0 0
      %1881 = vmatmul.mubr.bf16.gmra.mrb[0].mxu0 %v1791
      %v1882 = vpop.f32.mrb[0].mxu0
      %v1883 = vadd.f32 0.0, %v1882
      %v1884 = vpop.f32.mrb[0].mxu0
      %v1885 = vpop.f32.mrb[0].mxu0
      %v1886 = vadd.f32 0.0, %v1885
      %v1887 = vpop.f32.mrb[0].mxu0
      %1888 = vmatprep.mubr.bf16.mxu0 0
      %1889 = vmatmul.mubr.bf16.gmra.mrb[0].mxu0 %v1794
      %v1890 = vpop.f32.mrb[0].mxu0
      %v1891 = vadd.f32 0.0, %v1890
      %v1892 = vpop.f32.mrb[0].mxu0
      %v1893 = vpop.f32.mrb[0].mxu0
      %v1894 = vadd.f32 0.0, %v1893
      %v1895 = vpop.f32.mrb[0].mxu0
      %1896 = vmatprep.mubr.bf16.mxu0 0
      %1897 = vmatmul.mubr.bf16.gmra.mrb[0].mxu0 %v1797
      %v1898 = vpop.f32.mrb[0].mxu0
      %v1899 = vadd.f32 0.0, %v1898
      %v1900 = vpop.f32.mrb[0].mxu0
      %v1901 = vpop.f32.mrb[0].mxu0
      %v1902 = vadd.f32 0.0, %v1901
      %v1903 = vpop.f32.mrb[0].mxu0
      %1904 = vmatprep.mubr.bf16.mxu0 0
      %1905 = vmatmul.mubr.bf16.gmra.mrb[0].mxu0 %v1800
      %v1906 = vpop.f32.mrb[0].mxu0
      %v1907 = vadd.f32 0.0, %v1906
      %v1908 = vpop.f32.mrb[0].mxu0
      %v1909 = vpop.f32.mrb[0].mxu0
      %v1910 = vadd.f32 0.0, %v1909
      %v1911 = vpop.f32.mrb[0].mxu0
      %1912 = vmatprep.mubr.bf16.mxu0 0
      %1913 = vmatmul.mubr.bf16.gmra.mrb[0].mxu0 %v1803
      %v1914 = vpop.f32.mrb[0].mxu0
      %v1915 = vadd.f32 0.0, %v1914
      %v1916 = vpop.f32.mrb[0].mxu0
      %v1917 = vpop.f32.mrb[0].mxu0
      %v1918 = vadd.f32 0.0, %v1917
      %v1919 = vpop.f32.mrb[0].mxu0
      %1920 = vmatprep.mubr.bf16.mxu0 0
      %1921 = vmatmul.mubr.bf16.gmra.mrb[0].mxu0 %v1806
      %v1922 = vpop.f32.mrb[0].mxu0
      %v1923 = vadd.f32 0.0, %v1922
      %v1924 = vpop.f32.mrb[0].mxu0
      %v1925 = vpop.f32.mrb[0].mxu0
      %v1926 = vadd.f32 0.0, %v1925
      %v1927 = vpop.f32.mrb[0].mxu0
      %1928 = vmatprep.mubr.bf16.mxu0 0
      %1929 = vmatmul.mubr.bf16.gmra.mrb[0].mxu0 %v1809
      %v1930 = vpop.f32.mrb[0].mxu0
      %v1931 = vadd.f32 0.0, %v1930
      %v1932 = vpop.f32.mrb[0].mxu0
      %v1933 = vpop.f32.mrb[0].mxu0
      %v1934 = vadd.f32 0.0, %v1933
      %v1935 = vpop.f32.mrb[0].mxu0
      %1936 = vmatprep.mubr.bf16.mxu0 0
      %1937 = vmatmul.mubr.bf16.gmra.mrb[0].mxu0 %v1812
      %v1938 = vpop.f32.mrb[0].mxu0
      %v1939 = vadd.f32 0.0, %v1938
      %v1940 = vpop.f32.mrb[0].mxu0
      %v1941 = vpop.f32.mrb[0].mxu0
      %v1942 = vadd.f32 0.0, %v1941
      %v1943 = vpop.f32.mrb[0].mxu0
      %1944 = vmatprep.mubr.bf16.mxu0 0
      %1945 = vmatmul.mubr.bf16.gmra.mrb[0].mxu0 %v1815
      %v1946 = vpop.f32.mrb[0].mxu0
      %v1947 = vadd.f32 0.0, %v1946
      %v1948 = vpop.f32.mrb[0].mxu0
      %v1949 = vpop.f32.mrb[0].mxu0
      %v1950 = vadd.f32 0.0, %v1949
      %v1951 = vpop.f32.mrb[0].mxu0
      %1952 = vmatprep.mubr.bf16.mxu0 0
      %1953 = vmatmul.mubr.bf16.gmra.mrb[0].mxu0 %v1818
      %v1954 = vpop.f32.mrb[0].mxu0
      %v1955 = vadd.f32 0.0, %v1954
      %v1956 = vpop.f32.mrb[0].mxu0
      %v1957 = vpop.f32.mrb[0].mxu0
      %v1958 = vadd.f32 0.0, %v1957
      %v1959 = vpop.f32.mrb[0].mxu0
      %1960 = vmatprep.mubr.bf16.mxu0 0
      %1961 = vmatmul.mubr.bf16.gmra.mrb[0].mxu0 %v1821
      %v1962 = vpop.f32.mrb[0].mxu0
      %v1963 = vadd.f32 0.0, %v1962
      %v1964 = vpop.f32.mrb[0].mxu0
      %v1965 = vpop.f32.mrb[0].mxu0
      %v1966 = vadd.f32 0.0, %v1965
      %v1967 = vpop.f32.mrb[0].mxu0
      %1968 = vmatprep.mubr.bf16.mxu0 0
      %1969 = vmatmul.mubr.bf16.gmra.mrb[0].mxu0 %v1824
      %v1970 = vpop.f32.mrb[0].mxu0
      %v1971 = vadd.f32 0.0, %v1970
      %v1972 = vpop.f32.mrb[0].mxu0
      %v1973 = vpop.f32.mrb[0].mxu0
      %v1974 = vadd.f32 0.0, %v1973
      %v1975 = vpop.f32.mrb[0].mxu0
      %1976 = vmatprep.mubr.bf16.mxu0 0
      %1977 = vmatmul.mubr.bf16.gmra.mrb[0].mxu0 %v1827
      %v1978 = vpop.f32.mrb[0].mxu0
      %v1979 = vadd.f32 0.0, %v1978
      %v1980 = vpop.f32.mrb[0].mxu0
      %v1981 = vpop.f32.mrb[0].mxu0
      %v1982 = vadd.f32 0.0, %v1981
      %v1983 = vpop.f32.mrb[0].mxu0
      %1984 = vmatprep.mubr.bf16.mxu0 0
      %1985 = vmatmul.mubr.bf16.gmra.mrb[0].mxu0 %v1830
      %v1986 = vpop.f32.mrb[0].mxu0
      %v1987 = vadd.f32 0.0, %v1986
      %v1988 = vpop.f32.mrb[0].mxu0
      %v1989 = vpop.f32.mrb[0].mxu0
      %v1990 = vadd.f32 0.0, %v1989
      %v1991 = vpop.f32.mrb[0].mxu0
      %1992 = vdwg.mxu0
      %v1993 = vadd.f32 %v1592, %v1867
      %v1994 = vadd.f32 %v1595, %v1870
      %v1995 = vadd.f32 %v1600, %v1875
      %v1996 = vadd.f32 %v1603, %v1878
      %v1997 = vadd.f32 %v1608, %v1883
      %v1998 = vadd.f32 %v1611, %v1886
      %v1999 = vadd.f32 %v1616, %v1891
      %v2000 = vadd.f32 %v1619, %v1894
      %v2001 = vadd.f32 %v1624, %v1899
      %v2002 = vadd.f32 %v1627, %v1902
      %v2003 = vadd.f32 %v1632, %v1907
      %v2004 = vadd.f32 %v1635, %v1910
      %v2005 = vadd.f32 %v1640, %v1915
      %v2006 = vadd.f32 %v1643, %v1918
      %v2007 = vadd.f32 %v1648, %v1923
      %v2008 = vadd.f32 %v1651, %v1926
      %v2009 = vadd.f32 %v1656, %v1931
      %v2010 = vadd.f32 %v1659, %v1934
      %v2011 = vadd.f32 %v1664, %v1939
      %v2012 = vadd.f32 %v1667, %v1942
      %v2013 = vadd.f32 %v1672, %v1947
      %v2014 = vadd.f32 %v1675, %v1950
      %v2015 = vadd.f32 %v1680, %v1955
      %v2016 = vadd.f32 %v1683, %v1958
      %v2017 = vadd.f32 %v1688, %v1963
      %v2018 = vadd.f32 %v1691, %v1966
      %v2019 = vadd.f32 %v1696, %v1971
      %v2020 = vadd.f32 %v1699, %v1974
      %v2021 = vadd.f32 %v1704, %v1979
      %v2022 = vadd.f32 %v1707, %v1982
      %v2023 = vadd.f32 %v1712, %v1987
      %v2024 = vadd.f32 %v1715, %v1990
      %v2025 = vld [vmem:[%s4] sm:$0x1]
      %v2027 = vlaneseq
      %v2028 = vshrl.u32 %v2027, 7
      %v2029 = vsub.s32 0, %v2028
      %v2030 = vrot.slane %v2025, %v2029
      %v2032 = vadd.f32 %v1993, %v2030
      %v2033 = vadd.f32 %v1994, %v2030
      %v2034 = vadd.f32 %v1995, %v2030
      %v2035 = vadd.f32 %v1996, %v2030
      %v2036 = vadd.f32 %v1997, %v2030
      %v2037 = vadd.f32 %v1998, %v2030
      %v2038 = vadd.f32 %v1999, %v2030
      %v2039 = vadd.f32 %v2000, %v2030
      %v2040 = vadd.f32 %v2001, %v2030
      %v2041 = vadd.f32 %v2002, %v2030
      %v2042 = vadd.f32 %v2003, %v2030
      %v2043 = vadd.f32 %v2004, %v2030
      %v2044 = vadd.f32 %v2005, %v2030
      %v2045 = vadd.f32 %v2006, %v2030
      %v2046 = vadd.f32 %v2007, %v2030
      %v2047 = vadd.f32 %v2008, %v2030
      %v2048 = vadd.f32 %v2009, %v2030
      %v2049 = vadd.f32 %v2010, %v2030
      %v2050 = vadd.f32 %v2011, %v2030
      %v2051 = vadd.f32 %v2012, %v2030
      %v2052 = vadd.f32 %v2013, %v2030
      %v2053 = vadd.f32 %v2014, %v2030
      %v2054 = vadd.f32 %v2015, %v2030
      %v2055 = vadd.f32 %v2016, %v2030
      %v2056 = vadd.f32 %v2017, %v2030
      %v2057 = vadd.f32 %v2018, %v2030
      %v2058 = vadd.f32 %v2019, %v2030
      %v2059 = vadd.f32 %v2020, %v2030
      %v2060 = vadd.f32 %v2021, %v2030
      %v2061 = vadd.f32 %v2022, %v2030
      %v2062 = vadd.f32 %v2023, %v2030
      %v2063 = vadd.f32 %v2024, %v2030
      %v2064 = vmax.f32 %v2032, 0.0
      %v2065 = vmax.f32 %v2033, 0.0
      %v2066 = vmax.f32 %v2034, 0.0
      %v2067 = vmax.f32 %v2035, 0.0
      %v2068 = vmax.f32 %v2036, 0.0
      %v2069 = vmax.f32 %v2037, 0.0
      %v2070 = vmax.f32 %v2038, 0.0
      %v2071 = vmax.f32 %v2039, 0.0
      %v2072 = vmax.f32 %v2040, 0.0
      %v2073 = vmax.f32 %v2041, 0.0
      %v2074 = vmax.f32 %v2042, 0.0
      %v2075 = vmax.f32 %v2043, 0.0
      %v2076 = vmax.f32 %v2044, 0.0
      %v2077 = vmax.f32 %v2045, 0.0
      %v2078 = vmax.f32 %v2046, 0.0
      %v2079 = vmax.f32 %v2047, 0.0
      %v2080 = vmax.f32 %v2048, 0.0
      %v2081 = vmax.f32 %v2049, 0.0
      %v2082 = vmax.f32 %v2050, 0.0
      %v2083 = vmax.f32 %v2051, 0.0
      %v2084 = vmax.f32 %v2052, 0.0
      %v2085 = vmax.f32 %v2053, 0.0
      %v2086 = vmax.f32 %v2054, 0.0
      %v2087 = vmax.f32 %v2055, 0.0
      %v2088 = vmax.f32 %v2056, 0.0
      %v2089 = vmax.f32 %v2057, 0.0
      %v2090 = vmax.f32 %v2058, 0.0
      %v2091 = vmax.f32 %v2059, 0.0
      %v2092 = vmax.f32 %v2060, 0.0
      %v2093 = vmax.f32 %v2061, 0.0
      %v2094 = vmax.f32 %v2062, 0.0
      %v2095 = vmax.f32 %v2063, 0.0
      %v2096 = vpack.c.bf16 %v2065, %v2064
      %v2097 = vpack.c.bf16 %v2067, %v2066
      %v2098 = vpack.c.bf16 %v2069, %v2068
      %v2099 = vpack.c.bf16 %v2071, %v2070
      %v2100 = vpack.c.bf16 %v2073, %v2072
      %v2101 = vpack.c.bf16 %v2075, %v2074
      %v2102 = vpack.c.bf16 %v2077, %v2076
      %v2103 = vpack.c.bf16 %v2079, %v2078
      %v2104 = vpack.c.bf16 %v2081, %v2080
      %v2105 = vpack.c.bf16 %v2083, %v2082
      %v2106 = vpack.c.bf16 %v2085, %v2084
      %v2107 = vpack.c.bf16 %v2087, %v2086
      %v2108 = vpack.c.bf16 %v2089, %v2088
      %v2109 = vpack.c.bf16 %v2091, %v2090
      %v2110 = vpack.c.bf16 %v2093, %v2092
      %v2111 = vpack.c.bf16 %v2095, %v2094
      %v2112 = vld [vmem:[%s5] sm:$0xf]
      %v2113 = vld [vmem:[%s5 + $0x4] sm:$0xf]
      %v2114 = vld [vmem:[%s5 + $0x8] sm:$0xf]
      %v2115 = vld [vmem:[%s5 + $0xc] sm:$0xf]
      %v2116 = vld [vmem:[%s6] sm:$0x1]
      %v2118 = vlaneseq
      %v2119 = vshrl.u32 %v2118, 7
      %v2120 = vsub.s32 0, %v2119
      %v2121 = vrot.slane %v2116, %v2120
      %v2127 = vunpack.c.l.b16 %v2112
      %v2128 = vunpack.c.l.b16 %v2113
      %v2129 = vunpack.c.l.b16 %v2114
      %v2130 = vunpack.c.l.b16 %v2115
      %v2131 = vpack.c.b16 %v2128, %v2127
      %v2132 = vpack.c.b16 %v2130, %v2129
      %v2136 = vsel %vm415, %v2096, 0
      %v2139 = vsel %vm415, %v2097, 0
      %v2142 = vsel %vm415, %v2098, 0
      %v2145 = vsel %vm415, %v2099, 0
      %v2148 = vsel %vm415, %v2100, 0
      %v2151 = vsel %vm415, %v2101, 0
      %v2154 = vsel %vm415, %v2102, 0
      %v2157 = vsel %vm415, %v2103, 0
      %v2160 = vsel %vm415, %v2104, 0
      %v2163 = vsel %vm415, %v2105, 0
      %v2166 = vsel %vm415, %v2106, 0
      %v2169 = vsel %vm415, %v2107, 0
      %v2172 = vsel %vm415, %v2108, 0
      %v2175 = vsel %vm415, %v2109, 0
      %v2178 = vsel %vm415, %v2110, 0
      %v2181 = vsel %vm415, %v2111, 0
      %2183 = vmatprep.subr.bf16.mxu0 0
      %2184 = vmatpush1.bf16.msra.mxu0 %v2131
      %2185 = vmatprep.subr.bf16.mxu0 0
      %2186 = vmatpush1.bf16.msra.mxu0 %v2132
      %2187 = vmatprep.subr.bf16.mxu0 0
      %2188 = vmatpush1.bf16.msra.mxu0 0
      %2189 = vmatprep.subr.bf16.mxu0 0
      %2190 = vmatpush1.bf16.msra.mxu0 0
      %2191 = vmatprep.subr.bf16.mxu0 0
      %2192 = vmatpush1.bf16.msra.mxu0 0
      %2193 = vmatprep.subr.bf16.mxu0 0
      %2194 = vmatpush1.bf16.msra.mxu0 0
      %2195 = vmatprep.subr.bf16.mxu0 0
      %2196 = vmatpush1.bf16.msra.mxu0 0
      %2197 = vmatprep.subr.bf16.mxu0 0
      %2198 = vmatpush1.bf16.msra.mxu0 0
      %2199 = vmatprep.subr.bf16.mxu0 0
      %2200 = vmatpush1.bf16.msra.mxu0 0
      %2201 = vmatprep.subr.bf16.mxu0 0
      %2202 = vmatpush1.bf16.msra.mxu0 0
      %2203 = vmatprep.subr.bf16.mxu0 0
      %2204 = vmatpush1.bf16.msra.mxu0 0
      %2205 = vmatprep.subr.bf16.mxu0 0
      %2206 = vmatpush1.bf16.msra.mxu0 0
      %2207 = vmatprep.subr.bf16.mxu0 0
      %2208 = vmatpush1.bf16.msra.mxu0 0
      %2209 = vmatprep.subr.bf16.mxu0 0
      %2210 = vmatpush1.bf16.msra.mxu0 0
      %2211 = vmatprep.subr.bf16.mxu0 0
      %2212 = vmatpush1.bf16.msra.mxu0 0
      %2213 = vmatprep.subr.bf16.mxu0 0
      %2214 = vmatpush1.bf16.msra.mxu0 0
      %2215 = vmatprep.mubr.bf16.mxu0 0
      %2216 = vmatmul.mubr.bf16.gmra.mrb[0].mxu0 %v2136
      %v2217 = vpop.f32.mrb[0].mxu0
      %v2218 = vadd.f32 %v2121, %v2217
      %v2219 = vpop.f32.mrb[0].mxu0
      %v2220 = vpop.f32.mrb[0].mxu0
      %v2221 = vadd.f32 %v2121, %v2220
      %v2222 = vpop.f32.mrb[0].mxu0
      %2223 = vmatprep.mubr.bf16.mxu0 0
      %2224 = vmatmul.mubr.bf16.gmra.mrb[0].mxu0 %v2139
      %v2225 = vpop.f32.mrb[0].mxu0
      %v2226 = vadd.f32 %v2121, %v2225
      %v2227 = vpop.f32.mrb[0].mxu0
      %v2228 = vpop.f32.mrb[0].mxu0
      %v2229 = vadd.f32 %v2121, %v2228
      %v2230 = vpop.f32.mrb[0].mxu0
      %2231 = vmatprep.mubr.bf16.mxu0 0
      %2232 = vmatmul.mubr.bf16.gmra.mrb[0].mxu0 %v2142
      %v2233 = vpop.f32.mrb[0].mxu0
      %v2234 = vadd.f32 %v2121, %v2233
      %v2235 = vpop.f32.mrb[0].mxu0
      %v2236 = vpop.f32.mrb[0].mxu0
      %v2237 = vadd.f32 %v2121, %v2236
      %v2238 = vpop.f32.mrb[0].mxu0
      %2239 = vmatprep.mubr.bf16.mxu0 0
      %2240 = vmatmul.mubr.bf16.gmra.mrb[0].mxu0 %v2145
      %v2241 = vpop.f32.mrb[0].mxu0
      %v2242 = vadd.f32 %v2121, %v2241
      %v2243 = vpop.f32.mrb[0].mxu0
      %v2244 = vpop.f32.mrb[0].mxu0
      %v2245 = vadd.f32 %v2121, %v2244
      %v2246 = vpop.f32.mrb[0].mxu0
      %2247 = vmatprep.mubr.bf16.mxu0 0
      %2248 = vmatmul.mubr.bf16.gmra.mrb[0].mxu0 %v2148
      %v2249 = vpop.f32.mrb[0].mxu0
      %v2250 = vadd.f32 %v2121, %v2249
      %v2251 = vpop.f32.mrb[0].mxu0
      %v2252 = vpop.f32.mrb[0].mxu0
      %v2253 = vadd.f32 %v2121, %v2252
      %v2254 = vpop.f32.mrb[0].mxu0
      %2255 = vmatprep.mubr.bf16.mxu0 0
      %2256 = vmatmul.mubr.bf16.gmra.mrb[0].mxu0 %v2151
      %v2257 = vpop.f32.mrb[0].mxu0
      %v2258 = vadd.f32 %v2121, %v2257
      %v2259 = vpop.f32.mrb[0].mxu0
      %v2260 = vpop.f32.mrb[0].mxu0
      %v2261 = vadd.f32 %v2121, %v2260
      %v2262 = vpop.f32.mrb[0].mxu0
      %2263 = vmatprep.mubr.bf16.mxu0 0
      %2264 = vmatmul.mubr.bf16.gmra.mrb[0].mxu0 %v2154
      %v2265 = vpop.f32.mrb[0].mxu0
      %v2266 = vadd.f32 %v2121, %v2265
      %v2267 = vpop.f32.mrb[0].mxu0
      %v2268 = vpop.f32.mrb[0].mxu0
      %v2269 = vadd.f32 %v2121, %v2268
      %v2270 = vpop.f32.mrb[0].mxu0
      %2271 = vmatprep.mubr.bf16.mxu0 0
      %2272 = vmatmul.mubr.bf16.gmra.mrb[0].mxu0 %v2157
      %v2273 = vpop.f32.mrb[0].mxu0
      %v2274 = vadd.f32 %v2121, %v2273
      %v2275 = vpop.f32.mrb[0].mxu0
      %v2276 = vpop.f32.mrb[0].mxu0
      %v2277 = vadd.f32 %v2121, %v2276
      %v2278 = vpop.f32.mrb[0].mxu0
      %2279 = vmatprep.mubr.bf16.mxu0 0
      %2280 = vmatmul.mubr.bf16.gmra.mrb[0].mxu0 %v2160
      %v2281 = vpop.f32.mrb[0].mxu0
      %v2282 = vadd.f32 %v2121, %v2281
      %v2283 = vpop.f32.mrb[0].mxu0
      %v2284 = vpop.f32.mrb[0].mxu0
      %v2285 = vadd.f32 %v2121, %v2284
      %v2286 = vpop.f32.mrb[0].mxu0
      %2287 = vmatprep.mubr.bf16.mxu0 0
      %2288 = vmatmul.mubr.bf16.gmra.mrb[0].mxu0 %v2163
      %v2289 = vpop.f32.mrb[0].mxu0
      %v2290 = vadd.f32 %v2121, %v2289
      %v2291 = vpop.f32.mrb[0].mxu0
      %v2292 = vpop.f32.mrb[0].mxu0
      %v2293 = vadd.f32 %v2121, %v2292
      %v2294 = vpop.f32.mrb[0].mxu0
      %2295 = vmatprep.mubr.bf16.mxu0 0
      %2296 = vmatmul.mubr.bf16.gmra.mrb[0].mxu0 %v2166
      %v2297 = vpop.f32.mrb[0].mxu0
      %v2298 = vadd.f32 %v2121, %v2297
      %v2299 = vpop.f32.mrb[0].mxu0
      %v2300 = vpop.f32.mrb[0].mxu0
      %v2301 = vadd.f32 %v2121, %v2300
      %v2302 = vpop.f32.mrb[0].mxu0
      %2303 = vmatprep.mubr.bf16.mxu0 0
      %2304 = vmatmul.mubr.bf16.gmra.mrb[0].mxu0 %v2169
      %v2305 = vpop.f32.mrb[0].mxu0
      %v2306 = vadd.f32 %v2121, %v2305
      %v2307 = vpop.f32.mrb[0].mxu0
      %v2308 = vpop.f32.mrb[0].mxu0
      %v2309 = vadd.f32 %v2121, %v2308
      %v2310 = vpop.f32.mrb[0].mxu0
      %2311 = vmatprep.mubr.bf16.mxu0 0
      %2312 = vmatmul.mubr.bf16.gmra.mrb[0].mxu0 %v2172
      %v2313 = vpop.f32.mrb[0].mxu0
      %v2314 = vadd.f32 %v2121, %v2313
      %v2315 = vpop.f32.mrb[0].mxu0
      %v2316 = vpop.f32.mrb[0].mxu0
      %v2317 = vadd.f32 %v2121, %v2316
      %v2318 = vpop.f32.mrb[0].mxu0
      %2319 = vmatprep.mubr.bf16.mxu0 0
      %2320 = vmatmul.mubr.bf16.gmra.mrb[0].mxu0 %v2175
      %v2321 = vpop.f32.mrb[0].mxu0
      %v2322 = vadd.f32 %v2121, %v2321
      %v2323 = vpop.f32.mrb[0].mxu0
      %v2324 = vpop.f32.mrb[0].mxu0
      %v2325 = vadd.f32 %v2121, %v2324
      %v2326 = vpop.f32.mrb[0].mxu0
      %2327 = vmatprep.mubr.bf16.mxu0 0
      %2328 = vmatmul.mubr.bf16.gmra.mrb[0].mxu0 %v2178
      %v2329 = vpop.f32.mrb[0].mxu0
      %v2330 = vadd.f32 %v2121, %v2329
      %v2331 = vpop.f32.mrb[0].mxu0
      %v2332 = vpop.f32.mrb[0].mxu0
      %v2333 = vadd.f32 %v2121, %v2332
      %v2334 = vpop.f32.mrb[0].mxu0
      %2335 = vmatprep.mubr.bf16.mxu0 0
      %2336 = vmatmul.mubr.bf16.gmra.mrb[0].mxu0 %v2181
      %v2337 = vpop.f32.mrb[0].mxu0
      %v2338 = vadd.f32 %v2121, %v2337
      %v2339 = vpop.f32.mrb[0].mxu0
      %v2340 = vpop.f32.mrb[0].mxu0
      %v2341 = vadd.f32 %v2121, %v2340
      %v2342 = vpop.f32.mrb[0].mxu0
      %2343 = vdwg.mxu0
      %v2344 = vunpack.c.l.bf16 %v280
      %v2345 = vunpack.c.l.bf16 %v281
      %v2346 = vunpack.c.l.bf16 %v282
      %v2347 = vunpack.c.l.bf16 %v283
      %v2348 = vunpack.c.l.bf16 %v284
      %v2349 = vunpack.c.l.bf16 %v285
      %v2350 = vunpack.c.l.bf16 %v286
      %v2351 = vunpack.c.l.bf16 %v287
      %v2352 = vunpack.c.l.bf16 %v288
      %v2353 = vunpack.c.l.bf16 %v289
      %v2354 = vunpack.c.l.bf16 %v290
      %v2355 = vunpack.c.l.bf16 %v291
      %v2356 = vunpack.c.l.bf16 %v292
      %v2357 = vunpack.c.l.bf16 %v293
      %v2358 = vunpack.c.l.bf16 %v294
      %v2359 = vunpack.c.l.bf16 %v295
      %v2360 = vunpack.c.l.bf16 %v296
      %v2361 = vunpack.c.l.bf16 %v297
      %v2362 = vunpack.c.l.bf16 %v298
      %v2363 = vunpack.c.l.bf16 %v299
      %v2364 = vunpack.c.l.bf16 %v300
      %v2365 = vunpack.c.l.bf16 %v301
      %v2366 = vunpack.c.l.bf16 %v302
      %v2367 = vunpack.c.l.bf16 %v303
      %v2368 = vunpack.c.l.bf16 %v304
      %v2369 = vunpack.c.l.bf16 %v305
      %v2370 = vunpack.c.l.bf16 %v306
      %v2371 = vunpack.c.l.bf16 %v307
      %v2372 = vunpack.c.l.bf16 %v308
      %v2373 = vunpack.c.l.bf16 %v309
      %v2374 = vunpack.c.l.bf16 %v310
      %v2375 = vunpack.c.l.bf16 %v311
      %v2376 = vadd.f32 %v2218, %v2344
      %v2377 = vadd.f32 %v2221, %v2345
      %v2378 = vadd.f32 %v2226, %v2346
      %v2379 = vadd.f32 %v2229, %v2347
      %v2380 = vadd.f32 %v2234, %v2348
      %v2381 = vadd.f32 %v2237, %v2349
      %v2382 = vadd.f32 %v2242, %v2350
      %v2383 = vadd.f32 %v2245, %v2351
      %v2384 = vadd.f32 %v2250, %v2352
      %v2385 = vadd.f32 %v2253, %v2353
      %v2386 = vadd.f32 %v2258, %v2354
      %v2387 = vadd.f32 %v2261, %v2355
      %v2388 = vadd.f32 %v2266, %v2356
      %v2389 = vadd.f32 %v2269, %v2357
      %v2390 = vadd.f32 %v2274, %v2358
      %v2391 = vadd.f32 %v2277, %v2359
      %v2392 = vadd.f32 %v2282, %v2360
      %v2393 = vadd.f32 %v2285, %v2361
      %v2394 = vadd.f32 %v2290, %v2362
      %v2395 = vadd.f32 %v2293, %v2363
      %v2396 = vadd.f32 %v2298, %v2364
      %v2397 = vadd.f32 %v2301, %v2365
      %v2398 = vadd.f32 %v2306, %v2366
      %v2399 = vadd.f32 %v2309, %v2367
      %v2400 = vadd.f32 %v2314, %v2368
      %v2401 = vadd.f32 %v2317, %v2369
      %v2402 = vadd.f32 %v2322, %v2370
      %v2403 = vadd.f32 %v2325, %v2371
      %v2404 = vadd.f32 %v2330, %v2372
      %v2405 = vadd.f32 %v2333, %v2373
      %v2406 = vadd.f32 %v2338, %v2374
      %v2407 = vadd.f32 %v2341, %v2375
      %v2408 = vmax.f32 %v2376, 0.0
      %v2409 = vmax.f32 %v2377, 0.0
      %v2410 = vmax.f32 %v2378, 0.0
      %v2411 = vmax.f32 %v2379, 0.0
      %v2412 = vmax.f32 %v2380, 0.0
      %v2413 = vmax.f32 %v2381, 0.0
      %v2414 = vmax.f32 %v2382, 0.0
      %v2415 = vmax.f32 %v2383, 0.0
      %v2416 = vmax.f32 %v2384, 0.0
      %v2417 = vmax.f32 %v2385, 0.0
      %v2418 = vmax.f32 %v2386, 0.0
      %v2419 = vmax.f32 %v2387, 0.0
      %v2420 = vmax.f32 %v2388, 0.0
      %v2421 = vmax.f32 %v2389, 0.0
      %v2422 = vmax.f32 %v2390, 0.0
      %v2423 = vmax.f32 %v2391, 0.0
      %v2424 = vmax.f32 %v2392, 0.0
      %v2425 = vmax.f32 %v2393, 0.0
      %v2426 = vmax.f32 %v2394, 0.0
      %v2427 = vmax.f32 %v2395, 0.0
      %v2428 = vmax.f32 %v2396, 0.0
      %v2429 = vmax.f32 %v2397, 0.0
      %v2430 = vmax.f32 %v2398, 0.0
      %v2431 = vmax.f32 %v2399, 0.0
      %v2432 = vmax.f32 %v2400, 0.0
      %v2433 = vmax.f32 %v2401, 0.0
      %v2434 = vmax.f32 %v2402, 0.0
      %v2435 = vmax.f32 %v2403, 0.0
      %v2436 = vmax.f32 %v2404, 0.0
      %v2437 = vmax.f32 %v2405, 0.0
      %v2438 = vmax.f32 %v2406, 0.0
      %v2439 = vmax.f32 %v2407, 0.0
      %v2440 = vpack.c.bf16 %v2409, %v2408
      %v2441 = vpack.c.bf16 %v2411, %v2410
      %v2442 = vpack.c.bf16 %v2413, %v2412
      %v2443 = vpack.c.bf16 %v2415, %v2414
      %v2444 = vpack.c.bf16 %v2417, %v2416
      %v2445 = vpack.c.bf16 %v2419, %v2418
      %v2446 = vpack.c.bf16 %v2421, %v2420
      %v2447 = vpack.c.bf16 %v2423, %v2422
      %v2448 = vpack.c.bf16 %v2425, %v2424
      %v2449 = vpack.c.bf16 %v2427, %v2426
      %v2450 = vpack.c.bf16 %v2429, %v2428
      %v2451 = vpack.c.bf16 %v2431, %v2430
      %v2452 = vpack.c.bf16 %v2433, %v2432
      %v2453 = vpack.c.bf16 %v2435, %v2434
      %v2454 = vpack.c.bf16 %v2437, %v2436
      %v2455 = vpack.c.bf16 %v2439, %v2438
      %v2472 = vunpack.c.l.b16 %v2440
      %v2473 = vunpack.c.h.b16 %v2440
      %v2474 = vunpack.c.l.b16 %v2441
      %v2475 = vunpack.c.h.b16 %v2441
      %v2476 = vunpack.c.l.b16 %v2442
      %v2477 = vunpack.c.h.b16 %v2442
      %v2478 = vunpack.c.l.b16 %v2443
      %v2479 = vunpack.c.h.b16 %v2443
      %v2480 = vunpack.c.l.b16 %v2444
      %v2481 = vunpack.c.h.b16 %v2444
      %v2482 = vunpack.c.l.b16 %v2445
      %v2483 = vunpack.c.h.b16 %v2445
      %v2484 = vunpack.c.l.b16 %v2446
      %v2485 = vunpack.c.h.b16 %v2446
      %v2486 = vunpack.c.l.b16 %v2447
      %v2487 = vunpack.c.h.b16 %v2447
      %v2488 = vunpack.c.l.b16 %v2448
      %v2489 = vunpack.c.h.b16 %v2448
      %v2490 = vunpack.c.l.b16 %v2449
      %v2491 = vunpack.c.h.b16 %v2449
      %v2492 = vunpack.c.l.b16 %v2450
      %v2493 = vunpack.c.h.b16 %v2450
      %v2494 = vunpack.c.l.b16 %v2451
      %v2495 = vunpack.c.h.b16 %v2451
      %v2496 = vunpack.c.l.b16 %v2452
      %v2497 = vunpack.c.h.b16 %v2452
      %v2498 = vunpack.c.l.b16 %v2453
      %v2499 = vunpack.c.h.b16 %v2453
      %v2500 = vunpack.c.l.b16 %v2454
      %v2501 = vunpack.c.h.b16 %v2454
      %v2502 = vunpack.c.l.b16 %v2455
      %v2503 = vunpack.c.h.b16 %v2455
      %v2504 = vpack.c.b16 %v2472, %v2472
      %v2505 = vpack.c.b16 %v2473, %v2473
      %v2506 = vpack.c.b16 %v2474, %v2474
      %v2507 = vpack.c.b16 %v2475, %v2475
      %v2508 = vpack.c.b16 %v2476, %v2476
      %v2509 = vpack.c.b16 %v2477, %v2477
      %v2510 = vpack.c.b16 %v2478, %v2478
      %v2511 = vpack.c.b16 %v2479, %v2479
      %v2512 = vpack.c.b16 %v2480, %v2480
      %v2513 = vpack.c.b16 %v2481, %v2481
      %v2514 = vpack.c.b16 %v2482, %v2482
      %v2515 = vpack.c.b16 %v2483, %v2483
      %v2516 = vpack.c.b16 %v2484, %v2484
      %v2517 = vpack.c.b16 %v2485, %v2485
      %v2518 = vpack.c.b16 %v2486, %v2486
      %v2519 = vpack.c.b16 %v2487, %v2487
      %v2520 = vpack.c.b16 %v2488, %v2488
      %v2521 = vpack.c.b16 %v2489, %v2489
      %v2522 = vpack.c.b16 %v2490, %v2490
      %v2523 = vpack.c.b16 %v2491, %v2491
      %v2524 = vpack.c.b16 %v2492, %v2492
      %v2525 = vpack.c.b16 %v2493, %v2493
      %v2526 = vpack.c.b16 %v2494, %v2494
      %v2527 = vpack.c.b16 %v2495, %v2495
      %v2528 = vpack.c.b16 %v2496, %v2496
      %v2529 = vpack.c.b16 %v2497, %v2497
      %v2530 = vpack.c.b16 %v2498, %v2498
      %v2531 = vpack.c.b16 %v2499, %v2499
      %v2532 = vpack.c.b16 %v2500, %v2500
      %v2533 = vpack.c.b16 %v2501, %v2501
      %v2534 = vpack.c.b16 %v2502, %v2502
      %v2535 = vpack.c.b16 %v2503, %v2503
      %vm2568 = vcmask 257024
      %2569 = vst.msk [vmem:[%s278] sm:$0xf] %vm2568, %v2504
      %2570 = vst.msk [vmem:[%s278 + $0x4] sm:$0xf] %vm2568, %v2505
      %2571 = vst.msk [vmem:[%s278 + $0x8] sm:$0xf] %vm2568, %v2506
      %2572 = vst.msk [vmem:[%s278 + $0xc] sm:$0xf] %vm2568, %v2507
      %2573 = vst.msk [vmem:[%s278 + $0x10] sm:$0xf] %vm2568, %v2508
      %2574 = vst.msk [vmem:[%s278 + $0x14] sm:$0xf] %vm2568, %v2509
      %2575 = vst.msk [vmem:[%s278 + $0x18] sm:$0xf] %vm2568, %v2510
      %2576 = vst.msk [vmem:[%s278 + $0x1c] sm:$0xf] %vm2568, %v2511
      %2577 = vst.msk [vmem:[%s278 + $0x20] sm:$0xf] %vm2568, %v2512
      %2578 = vst.msk [vmem:[%s278 + $0x24] sm:$0xf] %vm2568, %v2513
      %2579 = vst.msk [vmem:[%s278 + $0x28] sm:$0xf] %vm2568, %v2514
      %2580 = vst.msk [vmem:[%s278 + $0x2c] sm:$0xf] %vm2568, %v2515
      %2581 = vst.msk [vmem:[%s278 + $0x30] sm:$0xf] %vm2568, %v2516
      %2582 = vst.msk [vmem:[%s278 + $0x34] sm:$0xf] %vm2568, %v2517
      %2583 = vst.msk [vmem:[%s278 + $0x38] sm:$0xf] %vm2568, %v2518
      %2584 = vst.msk [vmem:[%s278 + $0x3c] sm:$0xf] %vm2568, %v2519
      %2585 = vst.msk [vmem:[%s278 + $0x40] sm:$0xf] %vm2568, %v2520
      %2586 = vst.msk [vmem:[%s278 + $0x44] sm:$0xf] %vm2568, %v2521
      %2587 = vst.msk [vmem:[%s278 + $0x48] sm:$0xf] %vm2568, %v2522
      %2588 = vst.msk [vmem:[%s278 + $0x4c] sm:$0xf] %vm2568, %v2523
      %2589 = vst.msk [vmem:[%s278 + $0x50] sm:$0xf] %vm2568, %v2524
      %2590 = vst.msk [vmem:[%s278 + $0x54] sm:$0xf] %vm2568, %v2525
      %2591 = vst.msk [vmem:[%s278 + $0x58] sm:$0xf] %vm2568, %v2526
      %2592 = vst.msk [vmem:[%s278 + $0x5c] sm:$0xf] %vm2568, %v2527
      %2593 = vst.msk [vmem:[%s278 + $0x60] sm:$0xf] %vm2568, %v2528
      %2594 = vst.msk [vmem:[%s278 + $0x64] sm:$0xf] %vm2568, %v2529
      %2595 = vst.msk [vmem:[%s278 + $0x68] sm:$0xf] %vm2568, %v2530
      %2596 = vst.msk [vmem:[%s278 + $0x6c] sm:$0xf] %vm2568, %v2531
      %2597 = vst.msk [vmem:[%s278 + $0x70] sm:$0xf] %vm2568, %v2532
      %2598 = vst.msk [vmem:[%s278 + $0x74] sm:$0xf] %vm2568, %v2533
      %2599 = vst.msk [vmem:[%s278 + $0x78] sm:$0xf] %vm2568, %v2534
      %2600 = vst.msk [vmem:[%s278 + $0x7c] sm:$0xf] %vm2568, %v2535
      %p2601 = scmp.lt.s32.totalorder %s18, 1
      %s2602 = scalar_select %p2601, %s18, 1
      %s2603 = smul.addr %s2602, 32
      %s2604 = smul.addr %s2603, 4
      %s2605 = scalar_lea.vmem %s7, %s2604
      // Predicated region
      $region49: #{resnext_bottleneck_forward.1} parent=47 // pred_check
        %p2606 = pneg %p188
      $region50: #{resnext_bottleneck_forward.1} parent=47 // pred_check_branch
        %2608 = sbr.rel (%p2606) target = $region52
      $region51: #{resnext_bottleneck_forward.1} parent=47 // pred_region
        _
      $region52: #{resnext_bottleneck_forward.1} parent=47 // pred_fallthru
        _
    $region48: #{resnext_bottleneck_forward.1} parent=5 // pred_fallthru
      _
    %p2609 = scmp.le.s32.totalorder 2, %s13
    // Predicated region
    $region53: #{resnext_bottleneck_forward.1} parent=5 // pred_check
      %p2610 = pneg %p2609
    $region54: #{resnext_bottleneck_forward.1} parent=5 // pred_check_branch
      %2612 = sbr.rel (%p2610) target = $region56
    $region55: #{resnext_bottleneck_forward.1} parent=5 // pred_region
      %s2613 = ssub.s32 %s13, 2
      // Predicated region
      $region57: #{resnext_bottleneck_forward.1} parent=55 // pred_check
        %p2614 = pneg %p194
      $region58: #{resnext_bottleneck_forward.1} parent=55 // pred_check_branch
        %2616 = sbr.rel (%p2614) target = $region60
      $region59: #{resnext_bottleneck_forward.1} parent=55 // pred_region
        %p2617 = scmp.lt.s32.totalorder %s19, 1
        %s2618 = scalar_select %p2617, %s19, 1
        %s2619 = smul.addr %s2618, 32
        %s2620 = smul.addr %s2619, 4
        %s2621 = scalar_lea.vmem %s7, %s2620
      $region60: #{resnext_bottleneck_forward.1} parent=55 // pred_fallthru
        _
    $region56: #{resnext_bottleneck_forward.1} parent=5 // pred_fallthru
      _
  $region6: #{resnext_bottleneck_forward.1} parent=0 // loop_footer
    %s17 = sadd.s32 1, %s13
  $region7: #{resnext_bottleneck_forward.1} parent=0 // loop_footer_branch
    %12 = sbr.rel target = $region3
  $region8: #{resnext_bottleneck_forward.1} parent=0 // loop_exit
    _

</llo_original>
